<compile_context>
chip_gen: v7x
topology: tpu7x:2x2x1
jax: 0.10.0
libtpu: 0.0.40
codegen_flags: <defaults>
</compile_context>

<pallas_src>
import functools

import jax
import jax.numpy as jnp
from jax.experimental import pallas as pl
from jax.experimental.pallas import tpu as pltpu

_LANE = 128          # feature dims padded to lane width
_SUBLANE_BF16 = 16   # bf16 packs 16 sublanes per vreg
_N_CHUNK = 512       # output-feature chunk -> bounds the live f32 accumulator


def _round_up(x: int, m: int) -> int:
    return ((x + m - 1) // m) * m


def _vmem_capacity_bytes() -> int:
    try:
        return int(pltpu.get_tpu_info().vmem_capacity_bytes)
    except Exception:
        return 64 << 20  # conservative default (v7x per-core VMEM)


# --------------------------------------------------------------------------
# Kernels
# --------------------------------------------------------------------------
def _resident_kernel(*refs, n_linear, dims_pad, n_chunk):
    """Weights VMEM-resident (constant-index BlockSpecs); batch-tiled grid."""
    x_ref, out_ref = refs[0], refs[-1]
    wb = refs[1:-1]
    h = x_ref[...]                                   # bf16 (tb, D0_pad)
    for l in range(n_linear):
        w_ref, b_ref = wb[2 * l], wb[2 * l + 1]
        d_out = dims_pad[l + 1]
        last = l == n_linear - 1
        chunks = []
        for c0 in range(0, d_out, n_chunk):          # bound live f32 intermediate
            cn = min(n_chunk, d_out - c0)
            y = jnp.dot(h, w_ref[:, c0:c0 + cn],
                        preferred_element_type=jnp.float32)
            y = y + b_ref[:, c0:c0 + cn]
            if last:
                out_ref[:, c0:c0 + cn] = y.astype(out_ref.dtype)
            else:
                chunks.append(jnp.maximum(y, 0.0).astype(jnp.bfloat16))
        if not last:
            h = chunks[0] if len(chunks) == 1 else jnp.concatenate(chunks, -1)


def _streamed_kernel(*refs, n_linear, dims_pad, n_chunk):
    """Weights stay in HBM (pl.ANY); manual double-buffered per-layer DMA so the
    layer-l matmul overlaps the layer-(l+1) weight fetch (small-batch path is
    weight-bandwidth bound)."""
    x_ref = refs[0]
    out_ref = refs[1 + 2 * n_linear]
    wbuf = refs[2 + 2 * n_linear]       # VMEM (2, max_din, max_dout) bf16
    sem = refs[3 + 2 * n_linear]        # DMA semaphores (2,)
    w_hbm = [refs[1 + 2 * l] for l in range(n_linear)]
    b_vmem = [refs[2 + 2 * l] for l in range(n_linear)]

    def w_copy(l, slot):
        din, dout = dims_pad[l], dims_pad[l + 1]
        return pltpu.make_async_copy(w_hbm[l], wbuf.at[slot, :din, :dout],
                                     sem.at[slot])

    w_copy(0, 0).start()                # prime layer-0 weight DMA
    h = x_ref[...]
    for l in range(n_linear):
        slot = l & 1
        din, dout = dims_pad[l], dims_pad[l + 1]
        w_copy(l, slot).wait()
        if l + 1 < n_linear:
            w_copy(l + 1, 1 - slot).start()   # prefetch next layer's weights
        last = l == n_linear - 1
        chunks = []
        for c0 in range(0, dout, n_chunk):
            cn = min(n_chunk, dout - c0)
            y = jnp.dot(h, wbuf[slot, :din, c0:c0 + cn],
                        preferred_element_type=jnp.float32)
            y = y + b_vmem[l][:, c0:c0 + cn]
            if last:
                out_ref[:, c0:c0 + cn] = y.astype(out_ref.dtype)
            else:
                chunks.append(jnp.maximum(y, 0.0).astype(jnp.bfloat16))
        if not last:
            h = chunks[0] if len(chunks) == 1 else jnp.concatenate(chunks, -1)


# --------------------------------------------------------------------------
# pallas_call builders
# --------------------------------------------------------------------------
def _resident_call(pdims, n_linear, tb, n_steps, vmem_limit, flops, bytes_acc,
                   single_buffer_weights):
    wkw = {"pipeline_mode": pl.Buffered(1)} if single_buffer_weights else {}
    in_specs = [pl.BlockSpec((tb, pdims[0]), lambda i: (i, 0))]
    for l in range(n_linear):
        in_specs.append(
            pl.BlockSpec((pdims[l], pdims[l + 1]), lambda i: (0, 0), **wkw))
        in_specs.append(pl.BlockSpec((1, pdims[l + 1]), lambda i: (0, 0), **wkw))
    kernel = functools.partial(_resident_kernel, n_linear=n_linear,
                               dims_pad=tuple(pdims), n_chunk=_N_CHUNK)
    return pl.pallas_call(
        kernel,
        out_shape=jax.ShapeDtypeStruct((n_steps * tb, pdims[-1]), jnp.float32),
        grid=(n_steps,),
        in_specs=in_specs,
        out_specs=pl.BlockSpec((tb, pdims[-1]), lambda i: (i, 0)),
        compiler_params=pltpu.CompilerParams(
            dimension_semantics=("parallel",),
            vmem_limit_bytes=vmem_limit),
        cost_estimate=pl.CostEstimate(flops=flops, transcendentals=0,
                                      bytes_accessed=bytes_acc),
    )


def _streamed_call(pdims, n_linear, tb, n_steps, vmem_limit, flops, bytes_acc):
    max_din, max_dout = max(pdims[:-1]), max(pdims[1:])
    in_specs = [pl.BlockSpec((tb, pdims[0]), lambda i: (i, 0))]
    for l in range(n_linear):
        in_specs.append(pl.BlockSpec(memory_space=pl.ANY))      # weight stays in HBM
        in_specs.append(pl.BlockSpec((1, pdims[l + 1]), lambda i: (0, 0)))
    kernel = functools.partial(_streamed_kernel, n_linear=n_linear,
                               dims_pad=tuple(pdims), n_chunk=_N_CHUNK)
    return pl.pallas_call(
        kernel,
        out_shape=jax.ShapeDtypeStruct((n_steps * tb, pdims[-1]), jnp.float32),
        grid=(n_steps,),
        in_specs=in_specs,
        out_specs=pl.BlockSpec((tb, pdims[-1]), lambda i: (i, 0)),
        scratch_shapes=[pltpu.VMEM((2, max_din, max_dout), jnp.bfloat16),
                        pltpu.SemaphoreType.DMA((2,))],
        compiler_params=pltpu.CompilerParams(
            dimension_semantics=("arbitrary",),
            vmem_limit_bytes=vmem_limit),
        cost_estimate=pl.CostEstimate(flops=flops, transcendentals=0,
                                      bytes_accessed=bytes_acc),
    )


# --------------------------------------------------------------------------
# Parameter prep (hoisted off the forward hot path) + forward
# --------------------------------------------------------------------------
def prepare_decoder_params(params):
    """One-time weight prep: zero-pad every feature dim to a multiple of 128
    lanes, cast weights to bf16 and biases to f32 row vectors.  Padding is
    exact: padded weight rows/cols and biases are zero; ReLU keeps padded
    lanes at zero."""
    dims = [params[0][0].shape[0]] + [w.shape[1] for (w, _) in params]
    pdims = [_round_up(d, _LANE) for d in dims]
    padded = []
    for l, (w, b) in enumerate(params):
        d_in, d_out = w.shape
        w_p = jnp.zeros((pdims[l], pdims[l + 1]), jnp.bfloat16)
        w_p = w_p.at[:d_in, :d_out].set(w.astype(jnp.bfloat16))
        b_p = jnp.zeros((1, pdims[l + 1]), jnp.float32)
        b_p = b_p.at[0, :d_out].set(b.astype(jnp.float32))
        padded.append((w_p, b_p))
    return {"padded": padded, "dims": dims, "pdims": pdims}


def decoder_forward(prepared, x):
    """Fused decoder forward.  prepared = prepare_decoder_params(params)."""
    dims, pdims = prepared["dims"], prepared["pdims"]
    padded = prepared["padded"]
    n_linear = len(padded)
    B, D0 = x.shape
    assert D0 == dims[0]

    # Batch tile: multiple of 16 sublanes (bf16 packing); tb=256 for big batches
    # fills the 256-wide v6e/v7x MXU input rows (v5e just does two MXU passes).
    if B <= 256:
        tb = _round_up(max(B, 1), _SUBLANE_BF16)
    else:
        tb = 256
    b_pad = _round_up(B, tb)
    n_steps = b_pad // tb

    # Pad + cast the activation only (weights prepared once at init).
    x_p = jnp.zeros((b_pad, pdims[0]), jnp.bfloat16)
    x_p = x_p.at[:B, :D0].set(x.astype(jnp.bfloat16))
    flat_wb = [a for pair in padded for a in pair]

    # VMEM footprint / path selection (generation-aware budget).
    weight_bytes = sum(int(a.size) * a.dtype.itemsize for a in flat_wb)
    bias_bytes = sum(int(b.size) * 4 for (_, b) in padded)
    max_din, max_dout = max(pdims[:-1]), max(pdims[1:])
    io_tiles = 2 * tb * pdims[0] * 2 + 2 * tb * pdims[-1] * 4   # dbl-buffered x/out
    live = tb * max(pdims) * 2 + tb * _N_CHUNK * 4              # bf16 h + f32 chunk
    headroom = 4 << 20
    # resident_need assumes default double-buffered weights so the non-Buffered
    # fallback also fits under the same limit (Buffered(1) only frees headroom).
    resident_need = 2 * weight_bytes + io_tiles + live + headroom
    streamed_need = 2 * max_din * max_dout * 2 + 2 * bias_bytes + io_tiles + live + headroom

    budget = int(0.8 * _vmem_capacity_bytes())
    flops = 2 * b_pad * sum(pdims[l] * pdims[l + 1] for l in range(n_linear))
    x_bytes = int(x_p.size) * 2
    out_bytes = b_pad * pdims[-1] * 4

    def _limit(need):
        return int(min(max(need, 32 << 20), max(budget, 32 << 20)))

    # Streamed (DMA/compute-overlapped) path when there is a single grid step
    # (decode-sized batch => weight-bandwidth bound), or when resident weights
    # would not fit this generation's VMEM.
    use_streamed = (n_steps == 1 and streamed_need <= budget) or (
        resident_need > budget and streamed_need <= budget)
    # TODO(synk): if even the largest single layer exceeds VMEM, a K/N-tiled
    # per-layer matmul fallback with Buffered(2) weight tiles is required.

    out_p = None
    if use_streamed:
        try:
            out_p = _streamed_call(
                pdims, n_linear, tb, n_steps, _limit(streamed_need), flops,
                x_bytes + n_steps * weight_bytes + out_bytes)(x_p, *flat_wb)
        except Exception:
            out_p = None  # fall back to the resident-weights path
    if out_p is None:
        bytes_acc = x_bytes + weight_bytes + out_bytes
        try:
            out_p = _resident_call(pdims, n_linear, tb, n_steps,
                                   _limit(resident_need), flops, bytes_acc,
                                   single_buffer_weights=True)(x_p, *flat_wb)
        except Exception:
            # pl.Buffered(1) unsupported on this jax version -> default buffering.
            out_p = _resident_call(pdims, n_linear, tb, n_steps,
                                   _limit(resident_need), flops, bytes_acc,
                                   single_buffer_weights=False)(x_p, *flat_wb)

    return out_p[:B, :dims[-1]]


# --------------------------------------------------------------------------
# Config / params / reference
# --------------------------------------------------------------------------
class DecoderConfig:
    def __init__(self, output_dim, input_dim, layer_number):
        self.output_dim = output_dim      # latent dim (decoder input width)
        self.input_dim = input_dim        # reconstructed dim (decoder output width)
        self.layer_number = layer_number  # number of doubling hidden layers


def init_decoder_params(config, key):
    """Deterministic params matching the PyTorch module's shapes.  Weights are
    stored pre-transposed as (D_in, D_out) so y = x @ W + b == torch x @ W.T + b."""
    params = []
    current_dim = config.output_dim
    dims = []
    for _ in range(config.layer_number):
        next_dim = int(current_dim * 2)
        dims.append((current_dim, next_dim))
        current_dim = next_dim
    dims.append((current_dim, config.input_dim))  # output layer

    for (d_in, d_out) in dims:
        key, wk, bk = jax.random.split(key, 3)
        bound = 1.0 / jnp.sqrt(jnp.float32(d_in))  # torch Linear default range
        w = jax.random.uniform(wk, (d_in, d_out), jnp.float32, -bound, bound)
        b = jax.random.uniform(bk, (d_out,), jnp.float32, -bound, bound)
        params.append((w, b))
    return params


def decoder_forward_ref(params, x):
    """Pure-JAX reference mirroring the kernel's bf16-operand / f32-accumulate math."""
    h = x.astype(jnp.bfloat16)
    n = len(params)
    for l, (w, b) in enumerate(params):
        y = jnp.dot(h, w.astype(jnp.bfloat16), preferred_element_type=jnp.float32) + b
        if l < n - 1:
            h = jnp.maximum(y, 0.0).astype(jnp.bfloat16)
        else:
            return y


if __name__ == "__main__":
    # Small config: latent 32 -> 64 -> 128 -> reconstruct 64
    config = DecoderConfig(output_dim=32, input_dim=64, layer_number=2)
    key = jax.random.PRNGKey(0)
    key, pkey, x1k, x2k = jax.random.split(key, 4)

    params = init_decoder_params(config, pkey)
    prepared = prepare_decoder_params(params)

    # Decode-sized batch: single grid step -> streamed-weights kernel.
    x1 = jax.random.normal(x1k, (8, config.output_dim), jnp.float32)
    out1 = jax.block_until_ready(decoder_forward(prepared, x1))
    ref1 = decoder_forward_ref(params, x1)
    assert out1.shape == (8, config.input_dim)
    assert jnp.allclose(out1, ref1, atol=2e-2, rtol=2e-2), (
        float(jnp.max(jnp.abs(out1 - ref1))))

    # Larger batch: multi-step "parallel" grid -> resident-weights kernel.
    x2 = jax.random.normal(x2k, (384, config.output_dim), jnp.float32)
    out2 = jax.block_until_ready(decoder_forward(prepared, x2))
    ref2 = decoder_forward_ref(params, x2)
    assert out2.shape == (384, config.input_dim)
    assert jnp.allclose(out2, ref2, atol=2e-2, rtol=2e-2), (
        float(jnp.max(jnp.abs(out2 - ref2))))

    print("KERNEL_OK")
</pallas_src>

<mosaic_0001>
module attributes {stable_mosaic.version = 11 : i64} {
  func.func @_streamed_kernel(%arg0: i32, %arg1: memref<16x128xbf16, #tpu.memory_space<vmem>>, %arg2: memref<128x128xbf16, #tpu.memory_space<any>>, %arg3: memref<1x128xf32, #tpu.memory_space<vmem>>, %arg4: memref<128x128xbf16, #tpu.memory_space<any>>, %arg5: memref<1x128xf32, #tpu.memory_space<vmem>>, %arg6: memref<128x128xbf16, #tpu.memory_space<any>>, %arg7: memref<1x128xf32, #tpu.memory_space<vmem>>, %arg8: memref<16x128xf32, #tpu.memory_space<vmem>>, %arg9: memref<2x128x128xbf16, #tpu.memory_space<vmem>>, %arg10: memref<2x!tpu.dma_semaphore, #tpu.memory_space<semaphore_mem>>) attributes {dimension_semantics = [#tpu.dimension_semantics<arbitrary>], iteration_bounds = array<i64: 1>, scalar_prefetch = 0 : i64, scratch_operands = 2 : i64, tpu.core_type = #tpu.core_type<tc>, window_params = [{transform_indices = @transform_0, window_bounds = array<i64: 16, 128>}, {}, {pipeline_mode = #tpu.pipeline_mode<synchronous>, transform_indices = @transform_2, window_bounds = array<i64: 1, 128>}, {}, {pipeline_mode = #tpu.pipeline_mode<synchronous>, transform_indices = @transform_4, window_bounds = array<i64: 1, 128>}, {}, {pipeline_mode = #tpu.pipeline_mode<synchronous>, transform_indices = @transform_6, window_bounds = array<i64: 1, 128>}, {transform_indices = @transform_7, window_bounds = array<i64: 16, 128>}]} {
    %c0_i32 = arith.constant 0 : i32
    %c0_i32_0 = arith.constant 0 : i32
    %c0_i32_1 = arith.constant 0 : i32
    %c0_i32_2 = arith.constant 0 : i32
    %0 = tpu.memref_slice %arg9[%c0_i32, %c0_i32_1, %c0_i32_2] : memref<2x128x128xbf16, #tpu.memory_space<vmem>> -> memref<1x128x128xbf16, #tpu.memory_space<vmem>>
    %1 = tpu.memref_squeeze %0 : memref<1x128x128xbf16, #tpu.memory_space<vmem>> -> memref<128x128xbf16, #tpu.memory_space<vmem>>
    %2 = tpu.memref_slice %arg10[%c0_i32_0] : memref<2x!tpu.dma_semaphore, #tpu.memory_space<semaphore_mem>> -> memref<1x!tpu.dma_semaphore, #tpu.memory_space<semaphore_mem>>
    %3 = tpu.memref_squeeze %2 : memref<1x!tpu.dma_semaphore, #tpu.memory_space<semaphore_mem>> -> memref<!tpu.dma_semaphore, #tpu.memory_space<semaphore_mem>>
    tpu.enqueue_dma source(%arg2 : memref<128x128xbf16, #tpu.memory_space<any>>) target(%1 : memref<128x128xbf16, #tpu.memory_space<vmem>>) target_semaphore(%3 : memref<!tpu.dma_semaphore, #tpu.memory_space<semaphore_mem>>)
    %c0 = arith.constant 0 : index
    %c0_3 = arith.constant 0 : index
    %4 = vector.load %arg1[%c0, %c0_3] : memref<16x128xbf16, #tpu.memory_space<vmem>>, vector<16x128xbf16>
    %c0_i32_4 = arith.constant 0 : i32
    %c0_i32_5 = arith.constant 0 : i32
    %c0_i32_6 = arith.constant 0 : i32
    %c0_i32_7 = arith.constant 0 : i32
    %5 = tpu.memref_slice %arg9[%c0_i32_4, %c0_i32_6, %c0_i32_7] : memref<2x128x128xbf16, #tpu.memory_space<vmem>> -> memref<1x128x128xbf16, #tpu.memory_space<vmem>>
    %6 = tpu.memref_squeeze %5 : memref<1x128x128xbf16, #tpu.memory_space<vmem>> -> memref<128x128xbf16, #tpu.memory_space<vmem>>
    %7 = tpu.memref_slice %arg10[%c0_i32_5] : memref<2x!tpu.dma_semaphore, #tpu.memory_space<semaphore_mem>> -> memref<1x!tpu.dma_semaphore, #tpu.memory_space<semaphore_mem>>
    %8 = tpu.memref_squeeze %7 : memref<1x!tpu.dma_semaphore, #tpu.memory_space<semaphore_mem>> -> memref<!tpu.dma_semaphore, #tpu.memory_space<semaphore_mem>>
    tpu.wait_dma2 semaphore(%8 : memref<!tpu.dma_semaphore, #tpu.memory_space<semaphore_mem>>) src(%arg2 : memref<128x128xbf16, #tpu.memory_space<any>>) dst(%6 : memref<128x128xbf16, #tpu.memory_space<vmem>>)
    %c1_i32 = arith.constant 1 : i32
    %c1_i32_8 = arith.constant 1 : i32
    %c0_i32_9 = arith.constant 0 : i32
    %c0_i32_10 = arith.constant 0 : i32
    %9 = tpu.memref_slice %arg9[%c1_i32, %c0_i32_9, %c0_i32_10] : memref<2x128x128xbf16, #tpu.memory_space<vmem>> -> memref<1x128x128xbf16, #tpu.memory_space<vmem>>
    %10 = tpu.memref_squeeze %9 : memref<1x128x128xbf16, #tpu.memory_space<vmem>> -> memref<128x128xbf16, #tpu.memory_space<vmem>>
    %11 = tpu.memref_slice %arg10[%c1_i32_8] : memref<2x!tpu.dma_semaphore, #tpu.memory_space<semaphore_mem>> -> memref<1x!tpu.dma_semaphore, #tpu.memory_space<semaphore_mem>>
    %12 = tpu.memref_squeeze %11 : memref<1x!tpu.dma_semaphore, #tpu.memory_space<semaphore_mem>> -> memref<!tpu.dma_semaphore, #tpu.memory_space<semaphore_mem>>
    tpu.enqueue_dma source(%arg4 : memref<128x128xbf16, #tpu.memory_space<any>>) target(%10 : memref<128x128xbf16, #tpu.memory_space<vmem>>) target_semaphore(%12 : memref<!tpu.dma_semaphore, #tpu.memory_space<semaphore_mem>>)
    %c0_11 = arith.constant 0 : index
    %c0_12 = arith.constant 0 : index
    %c0_13 = arith.constant 0 : index
    %13 = vector.load %arg9[%c0_11, %c0_12, %c0_13] : memref<2x128x128xbf16, #tpu.memory_space<vmem>>, vector<1x128x128xbf16>
    %14 = vector.shape_cast %13 : vector<1x128x128xbf16> to vector<128x128xbf16>
    %cst = arith.constant dense<0.000000e+00> : vector<16x128xf32>
    %15 = tpu.matmul %4, %14, %cst {dimension_numbers = #tpu.dot_dimension_numbers<[1], [0], [0], [1], [0, 0, 1, 1], [], []>} : vector<16x128xbf16>, vector<128x128xbf16>, vector<16x128xf32> -> vector<16x128xf32>
    %c0_14 = arith.constant 0 : index
    %c0_15 = arith.constant 0 : index
    %16 = vector.load %arg3[%c0_14, %c0_15] : memref<1x128xf32, #tpu.memory_space<vmem>>, vector<1x128xf32>
    %17 = vector.broadcast %16 : vector<1x128xf32> to vector<16x128xf32>
    %18 = arith.addf %15, %17 : vector<16x128xf32>
    %cst_16 = arith.constant 0.000000e+00 : f32
    %19 = vector.broadcast %cst_16 : f32 to vector<16x128xf32>
    %20 = arith.maximumf %18, %19 : vector<16x128xf32>
    %21 = arith.truncf %20 : vector<16x128xf32> to vector<16x128xbf16>
    %c1_i32_17 = arith.constant 1 : i32
    %c1_i32_18 = arith.constant 1 : i32
    %c0_i32_19 = arith.constant 0 : i32
    %c0_i32_20 = arith.constant 0 : i32
    %22 = tpu.memref_slice %arg9[%c1_i32_17, %c0_i32_19, %c0_i32_20] : memref<2x128x128xbf16, #tpu.memory_space<vmem>> -> memref<1x128x128xbf16, #tpu.memory_space<vmem>>
    %23 = tpu.memref_squeeze %22 : memref<1x128x128xbf16, #tpu.memory_space<vmem>> -> memref<128x128xbf16, #tpu.memory_space<vmem>>
    %24 = tpu.memref_slice %arg10[%c1_i32_18] : memref<2x!tpu.dma_semaphore, #tpu.memory_space<semaphore_mem>> -> memref<1x!tpu.dma_semaphore, #tpu.memory_space<semaphore_mem>>
    %25 = tpu.memref_squeeze %24 : memref<1x!tpu.dma_semaphore, #tpu.memory_space<semaphore_mem>> -> memref<!tpu.dma_semaphore, #tpu.memory_space<semaphore_mem>>
    tpu.wait_dma2 semaphore(%25 : memref<!tpu.dma_semaphore, #tpu.memory_space<semaphore_mem>>) src(%arg4 : memref<128x128xbf16, #tpu.memory_space<any>>) dst(%23 : memref<128x128xbf16, #tpu.memory_space<vmem>>)
    %c0_i32_21 = arith.constant 0 : i32
    %c0_i32_22 = arith.constant 0 : i32
    %c0_i32_23 = arith.constant 0 : i32
    %c0_i32_24 = arith.constant 0 : i32
    %26 = tpu.memref_slice %arg9[%c0_i32_21, %c0_i32_23, %c0_i32_24] : memref<2x128x128xbf16, #tpu.memory_space<vmem>> -> memref<1x128x128xbf16, #tpu.memory_space<vmem>>
    %27 = tpu.memref_squeeze %26 : memref<1x128x128xbf16, #tpu.memory_space<vmem>> -> memref<128x128xbf16, #tpu.memory_space<vmem>>
    %28 = tpu.memref_slice %arg10[%c0_i32_22] : memref<2x!tpu.dma_semaphore, #tpu.memory_space<semaphore_mem>> -> memref<1x!tpu.dma_semaphore, #tpu.memory_space<semaphore_mem>>
    %29 = tpu.memref_squeeze %28 : memref<1x!tpu.dma_semaphore, #tpu.memory_space<semaphore_mem>> -> memref<!tpu.dma_semaphore, #tpu.memory_space<semaphore_mem>>
    tpu.enqueue_dma source(%arg6 : memref<128x128xbf16, #tpu.memory_space<any>>) target(%27 : memref<128x128xbf16, #tpu.memory_space<vmem>>) target_semaphore(%29 : memref<!tpu.dma_semaphore, #tpu.memory_space<semaphore_mem>>)
    %c1 = arith.constant 1 : index
    %c0_25 = arith.constant 0 : index
    %c0_26 = arith.constant 0 : index
    %30 = vector.load %arg9[%c1, %c0_25, %c0_26] : memref<2x128x128xbf16, #tpu.memory_space<vmem>>, vector<1x128x128xbf16>
    %31 = vector.shape_cast %30 : vector<1x128x128xbf16> to vector<128x128xbf16>
    %cst_27 = arith.constant dense<0.000000e+00> : vector<16x128xf32>
    %32 = tpu.matmul %21, %31, %cst_27 {dimension_numbers = #tpu.dot_dimension_numbers<[1], [0], [0], [1], [0, 0, 1, 1], [], []>} : vector<16x128xbf16>, vector<128x128xbf16>, vector<16x128xf32> -> vector<16x128xf32>
    %c0_28 = arith.constant 0 : index
    %c0_29 = arith.constant 0 : index
    %33 = vector.load %arg5[%c0_28, %c0_29] : memref<1x128xf32, #tpu.memory_space<vmem>>, vector<1x128xf32>
    %34 = vector.broadcast %33 : vector<1x128xf32> to vector<16x128xf32>
    %35 = arith.addf %32, %34 : vector<16x128xf32>
    %cst_30 = arith.constant 0.000000e+00 : f32
    %36 = vector.broadcast %cst_30 : f32 to vector<16x128xf32>
    %37 = arith.maximumf %35, %36 : vector<16x128xf32>
    %38 = arith.truncf %37 : vector<16x128xf32> to vector<16x128xbf16>
    %c0_i32_31 = arith.constant 0 : i32
    %c0_i32_32 = arith.constant 0 : i32
    %c0_i32_33 = arith.constant 0 : i32
    %c0_i32_34 = arith.constant 0 : i32
    %39 = tpu.memref_slice %arg9[%c0_i32_31, %c0_i32_33, %c0_i32_34] : memref<2x128x128xbf16, #tpu.memory_space<vmem>> -> memref<1x128x128xbf16, #tpu.memory_space<vmem>>
    %40 = tpu.memref_squeeze %39 : memref<1x128x128xbf16, #tpu.memory_space<vmem>> -> memref<128x128xbf16, #tpu.memory_space<vmem>>
    %41 = tpu.memref_slice %arg10[%c0_i32_32] : memref<2x!tpu.dma_semaphore, #tpu.memory_space<semaphore_mem>> -> memref<1x!tpu.dma_semaphore, #tpu.memory_space<semaphore_mem>>
    %42 = tpu.memref_squeeze %41 : memref<1x!tpu.dma_semaphore, #tpu.memory_space<semaphore_mem>> -> memref<!tpu.dma_semaphore, #tpu.memory_space<semaphore_mem>>
    tpu.wait_dma2 semaphore(%42 : memref<!tpu.dma_semaphore, #tpu.memory_space<semaphore_mem>>) src(%arg6 : memref<128x128xbf16, #tpu.memory_space<any>>) dst(%40 : memref<128x128xbf16, #tpu.memory_space<vmem>>)
    %c0_35 = arith.constant 0 : index
    %c0_36 = arith.constant 0 : index
    %c0_37 = arith.constant 0 : index
    %43 = vector.load %arg9[%c0_35, %c0_36, %c0_37] : memref<2x128x128xbf16, #tpu.memory_space<vmem>>, vector<1x128x128xbf16>
    %44 = vector.shape_cast %43 : vector<1x128x128xbf16> to vector<128x128xbf16>
    %cst_38 = arith.constant dense<0.000000e+00> : vector<16x128xf32>
    %45 = tpu.matmul %38, %44, %cst_38 {dimension_numbers = #tpu.dot_dimension_numbers<[1], [0], [0], [1], [0, 0, 1, 1], [], []>} : vector<16x128xbf16>, vector<128x128xbf16>, vector<16x128xf32> -> vector<16x128xf32>
    %c0_39 = arith.constant 0 : index
    %c0_40 = arith.constant 0 : index
    %46 = vector.load %arg7[%c0_39, %c0_40] : memref<1x128xf32, #tpu.memory_space<vmem>>, vector<1x128xf32>
    %47 = vector.broadcast %46 : vector<1x128xf32> to vector<16x128xf32>
    %48 = arith.addf %45, %47 : vector<16x128xf32>
    %c0_41 = arith.constant 0 : index
    %c0_42 = arith.constant 0 : index
    %49 = vector.load %arg8[%c0_41, %c0_42] : memref<16x128xf32, #tpu.memory_space<vmem>>, vector<16x128xf32>
    tpu.vector_store %arg8[%c0_41, %c0_42], %48 {strides = array<i32>} : memref<16x128xf32, #tpu.memory_space<vmem>>, vector<16x128xf32>,
    return
  }
  func.func @transform_0(%arg0: i32) -> (i32, i32) {
    %c0_i32 = arith.constant 0 : i32
    %c0_i32_0 = arith.constant 0 : i32
    return %arg0, %c0_i32 : i32, i32
  }
  func.func @transform_2(%arg0: i32) -> (i32, i32) {
    %c0_i32 = arith.constant 0 : i32
    %c0_i32_0 = arith.constant 0 : i32
    %c0_i32_1 = arith.constant 0 : i32
    return %c0_i32, %c0_i32_0 : i32, i32
  }
  func.func @transform_4(%arg0: i32) -> (i32, i32) {
    %c0_i32 = arith.constant 0 : i32
    %c0_i32_0 = arith.constant 0 : i32
    %c0_i32_1 = arith.constant 0 : i32
    return %c0_i32, %c0_i32_0 : i32, i32
  }
  func.func @transform_6(%arg0: i32) -> (i32, i32) {
    %c0_i32 = arith.constant 0 : i32
    %c0_i32_0 = arith.constant 0 : i32
    %c0_i32_1 = arith.constant 0 : i32
    return %c0_i32, %c0_i32_0 : i32, i32
  }
  func.func @transform_7(%arg0: i32) -> (i32, i32) {
    %c0_i32 = arith.constant 0 : i32
    %c0_i32_0 = arith.constant 0 : i32
    return %arg0, %c0_i32 : i32, i32
  }
}

module attributes {stable_mosaic.version = 11 : i64} {
  func.func @_resident_kernel(%arg0: i32, %arg1: memref<16x128xbf16, #tpu.memory_space<vmem>>, %arg2: memref<128x128xbf16, #tpu.memory_space<vmem>>, %arg3: memref<1x128xf32, #tpu.memory_space<vmem>>, %arg4: memref<128x128xbf16, #tpu.memory_space<vmem>>, %arg5: memref<1x128xf32, #tpu.memory_space<vmem>>, %arg6: memref<128x128xbf16, #tpu.memory_space<vmem>>, %arg7: memref<1x128xf32, #tpu.memory_space<vmem>>, %arg8: memref<16x128xf32, #tpu.memory_space<vmem>>) attributes {dimension_semantics = [#tpu.dimension_semantics<parallel>], iteration_bounds = array<i64: 1>, scalar_prefetch = 0 : i64, scratch_operands = 0 : i64, tpu.core_type = #tpu.core_type<tc>, window_params = [{transform_indices = @transform_0, window_bounds = array<i64: 16, 128>}, {pipeline_mode = #tpu.pipeline_mode<synchronous>, transform_indices = @transform_1, window_bounds = array<i64: 128, 128>}, {pipeline_mode = #tpu.pipeline_mode<synchronous>, transform_indices = @transform_2, window_bounds = array<i64: 1, 128>}, {pipeline_mode = #tpu.pipeline_mode<synchronous>, transform_indices = @transform_3, window_bounds = array<i64: 128, 128>}, {pipeline_mode = #tpu.pipeline_mode<synchronous>, transform_indices = @transform_4, window_bounds = array<i64: 1, 128>}, {pipeline_mode = #tpu.pipeline_mode<synchronous>, transform_indices = @transform_5, window_bounds = array<i64: 128, 128>}, {pipeline_mode = #tpu.pipeline_mode<synchronous>, transform_indices = @transform_6, window_bounds = array<i64: 1, 128>}, {transform_indices = @transform_7, window_bounds = array<i64: 16, 128>}]} {
    %c0 = arith.constant 0 : index
    %c0_0 = arith.constant 0 : index
    %0 = vector.load %arg1[%c0, %c0_0] : memref<16x128xbf16, #tpu.memory_space<vmem>>, vector<16x128xbf16>
    %c0_1 = arith.constant 0 : index
    %c0_2 = arith.constant 0 : index
    %1 = vector.load %arg2[%c0_1, %c0_2] : memref<128x128xbf16, #tpu.memory_space<vmem>>, vector<128x128xbf16>
    %cst = arith.constant dense<0.000000e+00> : vector<16x128xf32>
    %2 = tpu.matmul %0, %1, %cst {dimension_numbers = #tpu.dot_dimension_numbers<[1], [0], [0], [1], [0, 0, 1, 1], [], []>} : vector<16x128xbf16>, vector<128x128xbf16>, vector<16x128xf32> -> vector<16x128xf32>
    %c0_3 = arith.constant 0 : index
    %c0_4 = arith.constant 0 : index
    %3 = vector.load %arg3[%c0_3, %c0_4] : memref<1x128xf32, #tpu.memory_space<vmem>>, vector<1x128xf32>
    %4 = vector.broadcast %3 : vector<1x128xf32> to vector<16x128xf32>
    %5 = arith.addf %2, %4 : vector<16x128xf32>
    %cst_5 = arith.constant 0.000000e+00 : f32
    %6 = vector.broadcast %cst_5 : f32 to vector<16x128xf32>
    %7 = arith.maximumf %5, %6 : vector<16x128xf32>
    %8 = arith.truncf %7 : vector<16x128xf32> to vector<16x128xbf16>
    %c0_6 = arith.constant 0 : index
    %c0_7 = arith.constant 0 : index
    %9 = vector.load %arg4[%c0_6, %c0_7] : memref<128x128xbf16, #tpu.memory_space<vmem>>, vector<128x128xbf16>
    %cst_8 = arith.constant dense<0.000000e+00> : vector<16x128xf32>
    %10 = tpu.matmul %8, %9, %cst_8 {dimension_numbers = #tpu.dot_dimension_numbers<[1], [0], [0], [1], [0, 0, 1, 1], [], []>} : vector<16x128xbf16>, vector<128x128xbf16>, vector<16x128xf32> -> vector<16x128xf32>
    %c0_9 = arith.constant 0 : index
    %c0_10 = arith.constant 0 : index
    %11 = vector.load %arg5[%c0_9, %c0_10] : memref<1x128xf32, #tpu.memory_space<vmem>>, vector<1x128xf32>
    %12 = vector.broadcast %11 : vector<1x128xf32> to vector<16x128xf32>
    %13 = arith.addf %10, %12 : vector<16x128xf32>
    %cst_11 = arith.constant 0.000000e+00 : f32
    %14 = vector.broadcast %cst_11 : f32 to vector<16x128xf32>
    %15 = arith.maximumf %13, %14 : vector<16x128xf32>
    %16 = arith.truncf %15 : vector<16x128xf32> to vector<16x128xbf16>
    %c0_12 = arith.constant 0 : index
    %c0_13 = arith.constant 0 : index
    %17 = vector.load %arg6[%c0_12, %c0_13] : memref<128x128xbf16, #tpu.memory_space<vmem>>, vector<128x128xbf16>
    %cst_14 = arith.constant dense<0.000000e+00> : vector<16x128xf32>
    %18 = tpu.matmul %16, %17, %cst_14 {dimension_numbers = #tpu.dot_dimension_numbers<[1], [0], [0], [1], [0, 0, 1, 1], [], []>} : vector<16x128xbf16>, vector<128x128xbf16>, vector<16x128xf32> -> vector<16x128xf32>
    %c0_15 = arith.constant 0 : index
    %c0_16 = arith.constant 0 : index
    %19 = vector.load %arg7[%c0_15, %c0_16] : memref<1x128xf32, #tpu.memory_space<vmem>>, vector<1x128xf32>
    %20 = vector.broadcast %19 : vector<1x128xf32> to vector<16x128xf32>
    %21 = arith.addf %18, %20 : vector<16x128xf32>
    %c0_17 = arith.constant 0 : index
    %c0_18 = arith.constant 0 : index
    %22 = vector.load %arg8[%c0_17, %c0_18] : memref<16x128xf32, #tpu.memory_space<vmem>>, vector<16x128xf32>
    tpu.vector_store %arg8[%c0_17, %c0_18], %21 {strides = array<i32>} : memref<16x128xf32, #tpu.memory_space<vmem>>, vector<16x128xf32>,
    return
  }
  func.func @transform_0(%arg0: i32) -> (i32, i32) {
    %c0_i32 = arith.constant 0 : i32
    %c0_i32_0 = arith.constant 0 : i32
    return %arg0, %c0_i32 : i32, i32
  }
  func.func @transform_1(%arg0: i32) -> (i32, i32) {
    %c0_i32 = arith.constant 0 : i32
    %c0_i32_0 = arith.constant 0 : i32
    %c0_i32_1 = arith.constant 0 : i32
    return %c0_i32, %c0_i32_0 : i32, i32
  }
  func.func @transform_2(%arg0: i32) -> (i32, i32) {
    %c0_i32 = arith.constant 0 : i32
    %c0_i32_0 = arith.constant 0 : i32
    %c0_i32_1 = arith.constant 0 : i32
    return %c0_i32, %c0_i32_0 : i32, i32
  }
  func.func @transform_3(%arg0: i32) -> (i32, i32) {
    %c0_i32 = arith.constant 0 : i32
    %c0_i32_0 = arith.constant 0 : i32
    %c0_i32_1 = arith.constant 0 : i32
    return %c0_i32, %c0_i32_0 : i32, i32
  }
  func.func @transform_4(%arg0: i32) -> (i32, i32) {
    %c0_i32 = arith.constant 0 : i32
    %c0_i32_0 = arith.constant 0 : i32
    %c0_i32_1 = arith.constant 0 : i32
    return %c0_i32, %c0_i32_0 : i32, i32
  }
  func.func @transform_5(%arg0: i32) -> (i32, i32) {
    %c0_i32 = arith.constant 0 : i32
    %c0_i32_0 = arith.constant 0 : i32
    %c0_i32_1 = arith.constant 0 : i32
    return %c0_i32, %c0_i32_0 : i32, i32
  }
  func.func @transform_6(%arg0: i32) -> (i32, i32) {
    %c0_i32 = arith.constant 0 : i32
    %c0_i32_0 = arith.constant 0 : i32
    %c0_i32_1 = arith.constant 0 : i32
    return %c0_i32, %c0_i32_0 : i32, i32
  }
  func.func @transform_7(%arg0: i32) -> (i32, i32) {
    %c0_i32 = arith.constant 0 : i32
    %c0_i32_0 = arith.constant 0 : i32
    return %arg0, %c0_i32 : i32, i32
  }
}

module attributes {stable_mosaic.version = 11 : i64} {
  func.func @_resident_kernel(%arg0: i32, %arg1: memref<16x128xbf16, #tpu.memory_space<vmem>>, %arg2: memref<128x128xbf16, #tpu.memory_space<vmem>>, %arg3: memref<1x128xf32, #tpu.memory_space<vmem>>, %arg4: memref<128x128xbf16, #tpu.memory_space<vmem>>, %arg5: memref<1x128xf32, #tpu.memory_space<vmem>>, %arg6: memref<128x128xbf16, #tpu.memory_space<vmem>>, %arg7: memref<1x128xf32, #tpu.memory_space<vmem>>, %arg8: memref<16x128xf32, #tpu.memory_space<vmem>>) attributes {dimension_semantics = [#tpu.dimension_semantics<parallel>], iteration_bounds = array<i64: 1>, scalar_prefetch = 0 : i64, scratch_operands = 0 : i64, tpu.core_type = #tpu.core_type<tc>, window_params = [{transform_indices = @transform_0, window_bounds = array<i64: 16, 128>}, {pipeline_mode = #tpu.pipeline_mode<synchronous>, transform_indices = @transform_1, window_bounds = array<i64: 128, 128>}, {pipeline_mode = #tpu.pipeline_mode<synchronous>, transform_indices = @transform_2, window_bounds = array<i64: 1, 128>}, {pipeline_mode = #tpu.pipeline_mode<synchronous>, transform_indices = @transform_3, window_bounds = array<i64: 128, 128>}, {pipeline_mode = #tpu.pipeline_mode<synchronous>, transform_indices = @transform_4, window_bounds = array<i64: 1, 128>}, {pipeline_mode = #tpu.pipeline_mode<synchronous>, transform_indices = @transform_5, window_bounds = array<i64: 128, 128>}, {pipeline_mode = #tpu.pipeline_mode<synchronous>, transform_indices = @transform_6, window_bounds = array<i64: 1, 128>}, {transform_indices = @transform_7, window_bounds = array<i64: 16, 128>}]} {
    %c0 = arith.constant 0 : index
    %c0_0 = arith.constant 0 : index
    %0 = vector.load %arg1[%c0, %c0_0] : memref<16x128xbf16, #tpu.memory_space<vmem>>, vector<16x128xbf16>
    %c0_1 = arith.constant 0 : index
    %c0_2 = arith.constant 0 : index
    %1 = vector.load %arg2[%c0_1, %c0_2] : memref<128x128xbf16, #tpu.memory_space<vmem>>, vector<128x128xbf16>
    %cst = arith.constant dense<0.000000e+00> : vector<16x128xf32>
    %2 = tpu.matmul %0, %1, %cst {dimension_numbers = #tpu.dot_dimension_numbers<[1], [0], [0], [1], [0, 0, 1, 1], [], []>} : vector<16x128xbf16>, vector<128x128xbf16>, vector<16x128xf32> -> vector<16x128xf32>
    %c0_3 = arith.constant 0 : index
    %c0_4 = arith.constant 0 : index
    %3 = vector.load %arg3[%c0_3, %c0_4] : memref<1x128xf32, #tpu.memory_space<vmem>>, vector<1x128xf32>
    %4 = vector.broadcast %3 : vector<1x128xf32> to vector<16x128xf32>
    %5 = arith.addf %2, %4 : vector<16x128xf32>
    %cst_5 = arith.constant 0.000000e+00 : f32
    %6 = vector.broadcast %cst_5 : f32 to vector<16x128xf32>
    %7 = arith.maximumf %5, %6 : vector<16x128xf32>
    %8 = arith.truncf %7 : vector<16x128xf32> to vector<16x128xbf16>
    %c0_6 = arith.constant 0 : index
    %c0_7 = arith.constant 0 : index
    %9 = vector.load %arg4[%c0_6, %c0_7] : memref<128x128xbf16, #tpu.memory_space<vmem>>, vector<128x128xbf16>
    %cst_8 = arith.constant dense<0.000000e+00> : vector<16x128xf32>
    %10 = tpu.matmul %8, %9, %cst_8 {dimension_numbers = #tpu.dot_dimension_numbers<[1], [0], [0], [1], [0, 0, 1, 1], [], []>} : vector<16x128xbf16>, vector<128x128xbf16>, vector<16x128xf32> -> vector<16x128xf32>
    %c0_9 = arith.constant 0 : index
    %c0_10 = arith.constant 0 : index
    %11 = vector.load %arg5[%c0_9, %c0_10] : memref<1x128xf32, #tpu.memory_space<vmem>>, vector<1x128xf32>
    %12 = vector.broadcast %11 : vector<1x128xf32> to vector<16x128xf32>
    %13 = arith.addf %10, %12 : vector<16x128xf32>
    %cst_11 = arith.constant 0.000000e+00 : f32
    %14 = vector.broadcast %cst_11 : f32 to vector<16x128xf32>
    %15 = arith.maximumf %13, %14 : vector<16x128xf32>
    %16 = arith.truncf %15 : vector<16x128xf32> to vector<16x128xbf16>
    %c0_12 = arith.constant 0 : index
    %c0_13 = arith.constant 0 : index
    %17 = vector.load %arg6[%c0_12, %c0_13] : memref<128x128xbf16, #tpu.memory_space<vmem>>, vector<128x128xbf16>
    %cst_14 = arith.constant dense<0.000000e+00> : vector<16x128xf32>
    %18 = tpu.matmul %16, %17, %cst_14 {dimension_numbers = #tpu.dot_dimension_numbers<[1], [0], [0], [1], [0, 0, 1, 1], [], []>} : vector<16x128xbf16>, vector<128x128xbf16>, vector<16x128xf32> -> vector<16x128xf32>
    %c0_15 = arith.constant 0 : index
    %c0_16 = arith.constant 0 : index
    %19 = vector.load %arg7[%c0_15, %c0_16] : memref<1x128xf32, #tpu.memory_space<vmem>>, vector<1x128xf32>
    %20 = vector.broadcast %19 : vector<1x128xf32> to vector<16x128xf32>
    %21 = arith.addf %18, %20 : vector<16x128xf32>
    %c0_17 = arith.constant 0 : index
    %c0_18 = arith.constant 0 : index
    %22 = vector.load %arg8[%c0_17, %c0_18] : memref<16x128xf32, #tpu.memory_space<vmem>>, vector<16x128xf32>
    tpu.vector_store %arg8[%c0_17, %c0_18], %21 {strides = array<i32>} : memref<16x128xf32, #tpu.memory_space<vmem>>, vector<16x128xf32>,
    return
  }
  func.func @transform_0(%arg0: i32) -> (i32, i32) {
    %c0_i32 = arith.constant 0 : i32
    %c0_i32_0 = arith.constant 0 : i32
    return %arg0, %c0_i32 : i32, i32
  }
  func.func @transform_1(%arg0: i32) -> (i32, i32) {
    %c0_i32 = arith.constant 0 : i32
    %c0_i32_0 = arith.constant 0 : i32
    %c0_i32_1 = arith.constant 0 : i32
    return %c0_i32, %c0_i32_0 : i32, i32
  }
  func.func @transform_2(%arg0: i32) -> (i32, i32) {
    %c0_i32 = arith.constant 0 : i32
    %c0_i32_0 = arith.constant 0 : i32
    %c0_i32_1 = arith.constant 0 : i32
    return %c0_i32, %c0_i32_0 : i32, i32
  }
  func.func @transform_3(%arg0: i32) -> (i32, i32) {
    %c0_i32 = arith.constant 0 : i32
    %c0_i32_0 = arith.constant 0 : i32
    %c0_i32_1 = arith.constant 0 : i32
    return %c0_i32, %c0_i32_0 : i32, i32
  }
  func.func @transform_4(%arg0: i32) -> (i32, i32) {
    %c0_i32 = arith.constant 0 : i32
    %c0_i32_0 = arith.constant 0 : i32
    %c0_i32_1 = arith.constant 0 : i32
    return %c0_i32, %c0_i32_0 : i32, i32
  }
  func.func @transform_5(%arg0: i32) -> (i32, i32) {
    %c0_i32 = arith.constant 0 : i32
    %c0_i32_0 = arith.constant 0 : i32
    %c0_i32_1 = arith.constant 0 : i32
    return %c0_i32, %c0_i32_0 : i32, i32
  }
  func.func @transform_6(%arg0: i32) -> (i32, i32) {
    %c0_i32 = arith.constant 0 : i32
    %c0_i32_0 = arith.constant 0 : i32
    %c0_i32_1 = arith.constant 0 : i32
    return %c0_i32, %c0_i32_0 : i32, i32
  }
  func.func @transform_7(%arg0: i32) -> (i32, i32) {
    %c0_i32 = arith.constant 0 : i32
    %c0_i32_0 = arith.constant 0 : i32
    return %arg0, %c0_i32 : i32, i32
  }
}

</mosaic_0001>

<llo_original>
// kernel: tpu_custom_call.1
$region0: #{tpu_custom_call.1}
  #allocation0 [shape = 'u32[]', space=smem, size = 0x4, offset = 0x4, fixed_abs, tag = 'smem constant byte address 0x4 - core index']
  #allocation1 [shape = 'u32[144,128]{1,0:T(1,128)}', space=vmem, size = 0x12000, scoped, tag = 'internal scratch']
  #allocation2 [shape = 'bf16[2,128,128]{2,1,0:T(16,128)(2,1)}', space=vmem, size = 0x10000, scoped, tag = 'scratch operand']
  #allocation3 [shape = 's32[2]{0}', space=sflag, size = 0x8, scoped, tag = 'scratch operand']
  #allocation8 [shape = 's32[]', space=sflag, size = 0x4, offset = 0, fixed_abs, tag = 'sflag constant byte address 0x0 - dummy sync flag']
  #allocation9 [shape = 's32[]', space=sflag, size = 0x4, offset = 0, fixed_abs, tag = 'sflag constant byte address 0x0 - dummy sync flag']
  #allocation10 [shape = 'u32[]', space=smem, size = 0x4, offset = 0x44, fixed_abs, tag = 'smem constant byte address 0x44 - assertion arg 0']
  #allocation11 [shape = 'u32[]', space=smem, size = 0x4, offset = 0x48, fixed_abs, tag = 'smem constant byte address 0x48 - assertion arg 1']
  #allocation12 [shape = 's32[]', space=sflag, size = 0x4, offset = 0, fixed_abs, tag = 'sflag constant byte address 0x0 - dummy sync flag']
  #allocation13 [shape = 's32[]', space=sflag, size = 0x4, offset = 0, fixed_abs, tag = 'sflag constant byte address 0x0 - dummy sync flag']
  #allocation14 [shape = 's32[]', space=sflag, size = 0x4, offset = 0, fixed_abs, tag = 'sflag constant byte address 0x0 - dummy sync flag']
  #allocation15 [shape = 's32[]', space=sflag, size = 0x4, offset = 0, fixed_abs, tag = 'sflag constant byte address 0x0 - dummy sync flag']
  %s0 = inlined_call_operand.hbm [shape: bf16[16,128], index: 0, kind: input, shape index: {}]
  %s1 = inlined_call_operand.hbm [shape: bf16[128,128], index: 1, kind: input, shape index: {}]
  %s2 = inlined_call_operand.vmem [shape: f32[1,128], index: 2, kind: input, shape index: {}]
  %s3 = inlined_call_operand.hbm [shape: bf16[128,128], index: 3, kind: input, shape index: {}]
  %s4 = inlined_call_operand.vmem [shape: f32[1,128], index: 4, kind: input, shape index: {}]
  %s5 = inlined_call_operand.hbm [shape: bf16[128,128], index: 5, kind: input, shape index: {}]
  %s6 = inlined_call_operand.vmem [shape: f32[1,128], index: 6, kind: input, shape index: {}]
  %s7 = inlined_call_operand.hbm [shape: f32[16,128], index: 7, kind: output, shape index: {}]
  %s8 = sld [smem:[#allocation0]]
  $region42: #{tpu_custom_call.1} parent=0
    _
  %s10 = ssub.s32 1, %s8
  %s11 = scalar_select 0, %s10, %s8
  $region1: #{tpu_custom_call.1} parent=0
    #allocation4 [shape = 'u8[4096]{0}', space=vmem, size = 0x1000, scoped, tag = 'input window, operand 0, single buffered']
    #allocation5 [shape = 's32[1]{0}', space=sflag, size = 0x4, scoped, tag = 'scoped memory for tpu_custom_call.1']
    #allocation6 [shape = 's32[1]{0}', space=sflag, size = 0x4, scoped, tag = 'scoped memory for tpu_custom_call.1']
    #allocation7 [shape = 'u8[8192]{0}', space=vmem, size = 0x2000, scoped, tag = 'output window, operand 0, single buffered']
    %12 = vsyncpa [#allocation5], 0
    %13 = vsyncpa [#allocation6], 0
    // Predicated region
    $region2: #{tpu_custom_call.1} parent=1 // pred_check
      _
    $region3: #{tpu_custom_call.1} parent=1 // pred_check_branch
      %15 = sbr.rel (0) target = $region5
    $region4: #{tpu_custom_call.1} parent=1 // pred_region
      %s17 = ssub.s32 128, 128
      %18 = vsyncadd [#allocation5], %s17
      %s19 = sshll.u32 [#allocation4], 4
      %s20 = int_to_ptr.vmem [resolvable:$true] %s19
      %25 = dma.hbm_to_vmem [thread:$0]  %s0, 128, %s20, [#allocation5], 64, 64, 4
    $region5: #{tpu_custom_call.1} parent=1 // pred_fallthru
      _
    // Predicated region
    $region6: #{tpu_custom_call.1} parent=1 // pred_check
      _
    $region7: #{tpu_custom_call.1} parent=1 // pred_check_branch
      %27 = sbr.rel (0) target = $region9
    $region8: #{tpu_custom_call.1} parent=1 // pred_region
      _
    $region9: #{tpu_custom_call.1} parent=1 // pred_fallthru
      _
    // Predicated region
    $region10: #{tpu_custom_call.1} parent=1 // pred_check
      _
    $region11: #{tpu_custom_call.1} parent=1 // pred_check_branch
      %29 = sbr.rel (0) target = $region13
    $region12: #{tpu_custom_call.1} parent=1 // pred_region
      _
    $region13: #{tpu_custom_call.1} parent=1 // pred_fallthru
      _
    // Predicated region
    $region14: #{tpu_custom_call.1} parent=1 // pred_check
      _
    $region15: #{tpu_custom_call.1} parent=1 // pred_check_branch
      %31 = sbr.rel (0) target = $region17
    $region16: #{tpu_custom_call.1} parent=1 // pred_region
      _
    $region17: #{tpu_custom_call.1} parent=1 // pred_fallthru
      _
    // Predicated region
    $region18: #{tpu_custom_call.1} parent=1 // pred_check
      _
    $region19: #{tpu_custom_call.1} parent=1 // pred_check_branch
      %33 = sbr.rel (0) target = $region21
    $region20: #{tpu_custom_call.1} parent=1 // pred_region
      %34 = dma.done [#allocation5], 128
    $region21: #{tpu_custom_call.1} parent=1 // pred_fallthru
      _
    // Predicated region
    $region22: #{tpu_custom_call.1} parent=1 // pred_check
      _
    $region23: #{tpu_custom_call.1} parent=1 // pred_check_branch
      %37 = sbr.rel target = $region25
    $region24: #{tpu_custom_call.1} parent=1 // pred_region
      %38 = sst [smem:[#allocation10]] [#allocation9]
      %39 = sst [smem:[#allocation11]] [#allocation8]
    $region25: #{tpu_custom_call.1} parent=1 // pred_fallthru
      _
    %41 = shalt.err (0)
    %s43 = sshll.u32 [#allocation2], 4
    %s44 = int_to_ptr.vmem [resolvable:$true] %s43
    %46 = dma.hbm_to_vmem [thread:$0]  %s1, 1024, %s44, [#allocation3]
    %v47 = vld [vmem:[#allocation4] sm:$0xf]
    %v48 = vld [vmem:[#allocation4 + $0x4] sm:$0xf]
    %s49 = smul.u32 4, 16
    %s50 = smul.u32 %s49, 1
    %s51 = sshll.u32 %s50, 4
    %52 = dma.done [#allocation3], %s51
    %s53 = scalar_lea.vmem [#allocation2], 64
    %s54 = scalar_lea.sflag [#allocation3], 1
    // Predicated region
    $region26: #{tpu_custom_call.1} parent=1 // pred_check
      _
    $region27: #{tpu_custom_call.1} parent=1 // pred_check_branch
      %56 = sbr.rel target = $region29
    $region28: #{tpu_custom_call.1} parent=1 // pred_region
      %57 = sst [smem:[#allocation10]] [#allocation13]
      %58 = sst [smem:[#allocation11]] [#allocation12]
    $region29: #{tpu_custom_call.1} parent=1 // pred_fallthru
      _
    %60 = shalt.err (0)
    %s62 = sshll.u32 %s53, 4
    %s63 = int_to_ptr.vmem [resolvable:$true] %s62
    %65 = dma.hbm_to_vmem [thread:$0]  %s3, 1024, %s63, %s54
    %v66 = vld [vmem:[#allocation2] sm:$0xff]
    %v67 = vld [vmem:[#allocation2 + $0x8] sm:$0xff]
    %v68 = vld [vmem:[#allocation2 + $0x10] sm:$0xff]
    %v69 = vld [vmem:[#allocation2 + $0x18] sm:$0xff]
    %v70 = vld [vmem:[#allocation2 + $0x20] sm:$0xff]
    %v71 = vld [vmem:[#allocation2 + $0x28] sm:$0xff]
    %v72 = vld [vmem:[#allocation2 + $0x30] sm:$0xff]
    %v73 = vld [vmem:[#allocation2 + $0x38] sm:$0xff]
    %v74 = vld [vmem:[%s2] sm:$0x1]
    %v76 = vlaneseq
    %v77 = vshrl.u32 %v76, 7
    %v78 = vsub.s32 0, %v77
    %v79 = vrot.slane %v74, %v78
    %v83 = vunpack.c.l.b16 %v47
    %v84 = vunpack.c.l.b16 %v48
    %v85 = vpack.c.b16 %v84, %v83
    %87 = vmatprep.subr.bf16.mxu0 0
    %88 = vmatpush1.bf16.msra.mxu0 %v66
    %89 = vmatprep.subr.bf16.mxu0 0
    %90 = vmatpush1.bf16.msra.mxu0 %v67
    %91 = vmatprep.subr.bf16.mxu0 0
    %92 = vmatpush1.bf16.msra.mxu0 %v68
    %93 = vmatprep.subr.bf16.mxu0 0
    %94 = vmatpush1.bf16.msra.mxu0 %v69
    %95 = vmatprep.subr.bf16.mxu0 0
    %96 = vmatpush1.bf16.msra.mxu0 %v70
    %97 = vmatprep.subr.bf16.mxu0 0
    %98 = vmatpush1.bf16.msra.mxu0 %v71
    %99 = vmatprep.subr.bf16.mxu0 0
    %100 = vmatpush1.bf16.msra.mxu0 %v72
    %101 = vmatprep.subr.bf16.mxu0 0
    %102 = vmatpush1.bf16.msra.mxu0 %v73
    %103 = vmatprep.subr.bf16.mxu0 0
    %104 = vmatpush1.bf16.msra.mxu0 0
    %105 = vmatprep.subr.bf16.mxu0 0
    %106 = vmatpush1.bf16.msra.mxu0 0
    %107 = vmatprep.subr.bf16.mxu0 0
    %108 = vmatpush1.bf16.msra.mxu0 0
    %109 = vmatprep.subr.bf16.mxu0 0
    %110 = vmatpush1.bf16.msra.mxu0 0
    %111 = vmatprep.subr.bf16.mxu0 0
    %112 = vmatpush1.bf16.msra.mxu0 0
    %113 = vmatprep.subr.bf16.mxu0 0
    %114 = vmatpush1.bf16.msra.mxu0 0
    %115 = vmatprep.subr.bf16.mxu0 0
    %116 = vmatpush1.bf16.msra.mxu0 0
    %117 = vmatprep.subr.bf16.mxu0 0
    %118 = vmatpush1.bf16.msra.mxu0 0
    %119 = vmatprep.mubr.bf16.mxu0 0
    %120 = vmatmul.mubr.bf16.gmra.mrb[0].mxu0 %v85
    %v121 = vpop.f32.mrb[0].mxu0
    %v122 = vadd.f32 %v79, %v121
    %v123 = vpop.f32.mrb[0].mxu0
    %v124 = vpop.f32.mrb[0].mxu0
    %v125 = vadd.f32 %v79, %v124
    %v126 = vpop.f32.mrb[0].mxu0
    %127 = vdwg.mxu0
    %v128 = vmax.f32 %v122, 0.0
    %v129 = vmax.f32 %v125, 0.0
    %v130 = vpack.c.bf16 %v129, %v128
    %s131 = sshll.u32 %s50, 4
    %132 = dma.done %s54, %s131
    // Predicated region
    $region30: #{tpu_custom_call.1} parent=1 // pred_check
      _
    $region31: #{tpu_custom_call.1} parent=1 // pred_check_branch
      %134 = sbr.rel target = $region33
    $region32: #{tpu_custom_call.1} parent=1 // pred_region
      %135 = sst [smem:[#allocation10]] [#allocation15]
      %136 = sst [smem:[#allocation11]] [#allocation14]
    $region33: #{tpu_custom_call.1} parent=1 // pred_fallthru
      _
    %138 = shalt.err (0)
    %s140 = sshll.u32 [#allocation2], 4
    %s141 = int_to_ptr.vmem [resolvable:$true] %s140
    %143 = dma.hbm_to_vmem [thread:$0]  %s5, 1024, %s141, [#allocation3]
    %v144 = vld [vmem:[%s53] sm:$0xff]
    %v145 = vld [vmem:[%s53 + $0x8] sm:$0xff]
    %v146 = vld [vmem:[%s53 + $0x10] sm:$0xff]
    %v147 = vld [vmem:[%s53 + $0x18] sm:$0xff]
    %v148 = vld [vmem:[%s53 + $0x20] sm:$0xff]
    %v149 = vld [vmem:[%s53 + $0x28] sm:$0xff]
    %v150 = vld [vmem:[%s53 + $0x30] sm:$0xff]
    %v151 = vld [vmem:[%s53 + $0x38] sm:$0xff]
    %v152 = vld [vmem:[%s4] sm:$0x1]
    %v154 = vlaneseq
    %v155 = vshrl.u32 %v154, 7
    %v156 = vsub.s32 0, %v155
    %v157 = vrot.slane %v152, %v156
    %159 = vmatprep.subr.bf16.mxu0 0
    %160 = vmatpush1.bf16.msra.mxu0 %v144
    %161 = vmatprep.subr.bf16.mxu0 0
    %162 = vmatpush1.bf16.msra.mxu0 %v145
    %163 = vmatprep.subr.bf16.mxu0 0
    %164 = vmatpush1.bf16.msra.mxu0 %v146
    %165 = vmatprep.subr.bf16.mxu0 0
    %166 = vmatpush1.bf16.msra.mxu0 %v147
    %167 = vmatprep.subr.bf16.mxu0 0
    %168 = vmatpush1.bf16.msra.mxu0 %v148
    %169 = vmatprep.subr.bf16.mxu0 0
    %170 = vmatpush1.bf16.msra.mxu0 %v149
    %171 = vmatprep.subr.bf16.mxu0 0
    %172 = vmatpush1.bf16.msra.mxu0 %v150
    %173 = vmatprep.subr.bf16.mxu0 0
    %174 = vmatpush1.bf16.msra.mxu0 %v151
    %175 = vmatprep.subr.bf16.mxu0 0
    %176 = vmatpush1.bf16.msra.mxu0 0
    %177 = vmatprep.subr.bf16.mxu0 0
    %178 = vmatpush1.bf16.msra.mxu0 0
    %179 = vmatprep.subr.bf16.mxu0 0
    %180 = vmatpush1.bf16.msra.mxu0 0
    %181 = vmatprep.subr.bf16.mxu0 0
    %182 = vmatpush1.bf16.msra.mxu0 0
    %183 = vmatprep.subr.bf16.mxu0 0
    %184 = vmatpush1.bf16.msra.mxu0 0
    %185 = vmatprep.subr.bf16.mxu0 0
    %186 = vmatpush1.bf16.msra.mxu0 0
    %187 = vmatprep.subr.bf16.mxu0 0
    %188 = vmatpush1.bf16.msra.mxu0 0
    %189 = vmatprep.subr.bf16.mxu0 0
    %190 = vmatpush1.bf16.msra.mxu0 0
    %191 = vmatprep.mubr.bf16.mxu0 0
    %192 = vmatmul.mubr.bf16.gmra.mrb[0].mxu0 %v130
    %v193 = vpop.f32.mrb[0].mxu0
    %v194 = vadd.f32 %v157, %v193
    %v195 = vpop.f32.mrb[0].mxu0
    %v196 = vpop.f32.mrb[0].mxu0
    %v197 = vadd.f32 %v157, %v196
    %v198 = vpop.f32.mrb[0].mxu0
    %199 = vdwg.mxu0
    %v200 = vmax.f32 %v194, 0.0
    %v201 = vmax.f32 %v197, 0.0
    %v202 = vpack.c.bf16 %v201, %v200
    %s203 = sshll.u32 %s50, 4
    %204 = dma.done [#allocation3], %s203
    %v205 = vld [vmem:[#allocation2] sm:$0xff]
    %v206 = vld [vmem:[#allocation2 + $0x8] sm:$0xff]
    %v207 = vld [vmem:[#allocation2 + $0x10] sm:$0xff]
    %v208 = vld [vmem:[#allocation2 + $0x18] sm:$0xff]
    %v209 = vld [vmem:[#allocation2 + $0x20] sm:$0xff]
    %v210 = vld [vmem:[#allocation2 + $0x28] sm:$0xff]
    %v211 = vld [vmem:[#allocation2 + $0x30] sm:$0xff]
    %v212 = vld [vmem:[#allocation2 + $0x38] sm:$0xff]
    %v213 = vld [vmem:[%s6] sm:$0x1]
    %v215 = vlaneseq
    %v216 = vshrl.u32 %v215, 7
    %v217 = vsub.s32 0, %v216
    %v218 = vrot.slane %v213, %v217
    %220 = vmatprep.subr.bf16.mxu0 0
    %221 = vmatpush1.bf16.msra.mxu0 %v205
    %222 = vmatprep.subr.bf16.mxu0 0
    %223 = vmatpush1.bf16.msra.mxu0 %v206
    %224 = vmatprep.subr.bf16.mxu0 0
    %225 = vmatpush1.bf16.msra.mxu0 %v207
    %226 = vmatprep.subr.bf16.mxu0 0
    %227 = vmatpush1.bf16.msra.mxu0 %v208
    %228 = vmatprep.subr.bf16.mxu0 0
    %229 = vmatpush1.bf16.msra.mxu0 %v209
    %230 = vmatprep.subr.bf16.mxu0 0
    %231 = vmatpush1.bf16.msra.mxu0 %v210
    %232 = vmatprep.subr.bf16.mxu0 0
    %233 = vmatpush1.bf16.msra.mxu0 %v211
    %234 = vmatprep.subr.bf16.mxu0 0
    %235 = vmatpush1.bf16.msra.mxu0 %v212
    %236 = vmatprep.subr.bf16.mxu0 0
    %237 = vmatpush1.bf16.msra.mxu0 0
    %238 = vmatprep.subr.bf16.mxu0 0
    %239 = vmatpush1.bf16.msra.mxu0 0
    %240 = vmatprep.subr.bf16.mxu0 0
    %241 = vmatpush1.bf16.msra.mxu0 0
    %242 = vmatprep.subr.bf16.mxu0 0
    %243 = vmatpush1.bf16.msra.mxu0 0
    %244 = vmatprep.subr.bf16.mxu0 0
    %245 = vmatpush1.bf16.msra.mxu0 0
    %246 = vmatprep.subr.bf16.mxu0 0
    %247 = vmatpush1.bf16.msra.mxu0 0
    %248 = vmatprep.subr.bf16.mxu0 0
    %249 = vmatpush1.bf16.msra.mxu0 0
    %250 = vmatprep.subr.bf16.mxu0 0
    %251 = vmatpush1.bf16.msra.mxu0 0
    %252 = vmatprep.mubr.bf16.mxu0 0
    %253 = vmatmul.mubr.bf16.gmra.mrb[0].mxu0 %v202
    %v254 = vpop.f32.mrb[0].mxu0
    %v255 = vadd.f32 %v218, %v254
    %v256 = vpop.f32.mrb[0].mxu0
    %v257 = vpop.f32.mrb[0].mxu0
    %v258 = vadd.f32 %v218, %v257
    %v259 = vpop.f32.mrb[0].mxu0
    %260 = vdwg.mxu0
    %261 = vst [vmem:[#allocation7] sm:$0xff] %v255
    %262 = vst [vmem:[#allocation7 + $0x8] sm:$0xff] %v258
    // Predicated region
    $region34: #{tpu_custom_call.1} parent=1 // pred_check
      _
    $region35: #{tpu_custom_call.1} parent=1 // pred_check_branch
      %264 = sbr.rel (0) target = $region37
    $region36: #{tpu_custom_call.1} parent=1 // pred_region
      %s266 = ssub.s32 256, 256
      %267 = vsyncadd [#allocation6], %s266
      %s268 = sshll.u32 [#allocation7], 4
      %s269 = int_to_ptr.vmem [resolvable:$true] %s268
      %274 = dma.vmem_to_hbm [thread:$0]  %s269, 256, %s7, [#allocation6], 128, 128, 8
    $region37: #{tpu_custom_call.1} parent=1 // pred_fallthru
      _
    // Predicated region
    $region38: #{tpu_custom_call.1} parent=1 // pred_check
      _
    $region39: #{tpu_custom_call.1} parent=1 // pred_check_branch
      %276 = sbr.rel (0) target = $region41
    $region40: #{tpu_custom_call.1} parent=1 // pred_region
      %277 = dma.done [#allocation6], 256
    $region41: #{tpu_custom_call.1} parent=1 // pred_fallthru
      _
    %278 = vsyncpa [#allocation5], 1
    %279 = vsyncpa [#allocation6], 1
  %280 = vsyncmov [#allocation3]
  %s281 = vpop.sfrf %280
  %p282 = scmp.eq.s32.totalorder %s281, 0
  %p283 = pneg %p282
  %285 = shalt.err (%p283)
  %s286 = scalar_lea.sflag [#allocation3], 1
  %287 = vsyncmov %s286
  %s288 = vpop.sfrf %287
  %p289 = scmp.eq.s32.totalorder %s288, 0
  %p290 = pneg %p289
  %292 = shalt.err (%p290)

// kernel: tpu_custom_call.1
$region0: #{tpu_custom_call.1}
  #allocation0 [shape = 'u32[]', space=smem, size = 0x4, offset = 0x4, fixed_abs, tag = 'smem constant byte address 0x4 - core index']
  #allocation1 [shape = 'u32[144,128]{1,0:T(1,128)}', space=vmem, size = 0x12000, scoped, tag = 'internal scratch']
  %s0 = inlined_call_operand.hbm [shape: bf16[16,128], index: 0, kind: input, shape index: {}]
  %s1 = inlined_call_operand.hbm [shape: bf16[128,128], index: 1, kind: input, shape index: {}]
  %s2 = inlined_call_operand.vmem [shape: f32[1,128], index: 2, kind: input, shape index: {}]
  %s3 = inlined_call_operand.hbm [shape: bf16[128,128], index: 3, kind: input, shape index: {}]
  %s4 = inlined_call_operand.vmem [shape: f32[1,128], index: 4, kind: input, shape index: {}]
  %s5 = inlined_call_operand.hbm [shape: bf16[128,128], index: 5, kind: input, shape index: {}]
  %s6 = inlined_call_operand.vmem [shape: f32[1,128], index: 6, kind: input, shape index: {}]
  %s7 = inlined_call_operand.hbm [shape: f32[16,128], index: 7, kind: output, shape index: {}]
  %s8 = sld [smem:[#allocation0]]
  $region54: #{tpu_custom_call.1} parent=0
    _
  %s10 = ssub.s32 1, %s8
  %s11 = scalar_select 0, %s10, %s8
  $region1: #{tpu_custom_call.1} parent=0
    #allocation2 [shape = 'u8[4096]{0}', space=vmem, size = 0x1000, scoped, tag = 'input window, operand 0, single buffered']
    #allocation3 [shape = 's32[1]{0}', space=sflag, size = 0x4, scoped, tag = 'scoped memory for tpu_custom_call.1']
    #allocation4 [shape = 's32[1]{0}', space=sflag, size = 0x4, scoped, tag = 'scoped memory for tpu_custom_call.1']
    #allocation5 [shape = 'u8[32768]{0}', space=vmem, size = 0x8000, scoped, tag = 'input window, operand 1, single buffered']
    #allocation6 [shape = 's32[1]{0}', space=sflag, size = 0x4, scoped, tag = 'scoped memory for tpu_custom_call.1']
    #allocation7 [shape = 'u8[32768]{0}', space=vmem, size = 0x8000, scoped, tag = 'input window, operand 3, single buffered']
    #allocation8 [shape = 'u8[32768]{0}', space=vmem, size = 0x8000, scoped, tag = 'input window, operand 5, single buffered']
    #allocation9 [shape = 's32[1]{0}', space=sflag, size = 0x4, scoped, tag = 'scoped memory for tpu_custom_call.1']
    #allocation10 [shape = 'u8[8192]{0}', space=vmem, size = 0x2000, scoped, tag = 'output window, operand 0, single buffered']
    %12 = vsyncpa [#allocation3], 0
    %13 = vsyncpa [#allocation6], 0
    %14 = vsyncpa [#allocation9], 0
    %15 = vsyncpa [#allocation4], 0
    // Predicated region
    $region2: #{tpu_custom_call.1} parent=1 // pred_check
      _
    $region3: #{tpu_custom_call.1} parent=1 // pred_check_branch
      %17 = sbr.rel (0) target = $region5
    $region4: #{tpu_custom_call.1} parent=1 // pred_region
      %s19 = ssub.s32 128, 128
      %20 = vsyncadd [#allocation3], %s19
      %s21 = sshll.u32 [#allocation2], 4
      %s22 = int_to_ptr.vmem [resolvable:$true] %s21
      %27 = dma.hbm_to_vmem [thread:$0]  %s0, 128, %s22, [#allocation3], 64, 64, 4
    $region5: #{tpu_custom_call.1} parent=1 // pred_fallthru
      _
    // Predicated region
    $region6: #{tpu_custom_call.1} parent=1 // pred_check
      _
    $region7: #{tpu_custom_call.1} parent=1 // pred_check_branch
      %29 = sbr.rel (0) target = $region9
    $region8: #{tpu_custom_call.1} parent=1 // pred_region
      %s31 = ssub.s32 1024, 1024
      %32 = vsyncadd [#allocation6], %s31
      %s33 = sshll.u32 [#allocation5], 4
      %s34 = int_to_ptr.vmem [resolvable:$true] %s33
      %39 = dma.hbm_to_vmem [thread:$0]  %s1, 1024, %s34, [#allocation6], 64, 64, 4
    $region9: #{tpu_custom_call.1} parent=1 // pred_fallthru
      _
    // Predicated region
    $region10: #{tpu_custom_call.1} parent=1 // pred_check
      _
    $region11: #{tpu_custom_call.1} parent=1 // pred_check_branch
      %41 = sbr.rel (0) target = $region13
    $region12: #{tpu_custom_call.1} parent=1 // pred_region
      _
    $region13: #{tpu_custom_call.1} parent=1 // pred_fallthru
      _
    // Predicated region
    $region14: #{tpu_custom_call.1} parent=1 // pred_check
      _
    $region15: #{tpu_custom_call.1} parent=1 // pred_check_branch
      %43 = sbr.rel (0) target = $region17
    $region16: #{tpu_custom_call.1} parent=1 // pred_region
      %s45 = ssub.s32 1024, 1024
      %46 = vsyncadd [#allocation6], %s45
      %s47 = sshll.u32 [#allocation7], 4
      %s48 = int_to_ptr.vmem [resolvable:$true] %s47
      %53 = dma.hbm_to_vmem [thread:$0]  %s3, 1024, %s48, [#allocation6], 64, 64, 4
    $region17: #{tpu_custom_call.1} parent=1 // pred_fallthru
      _
    // Predicated region
    $region18: #{tpu_custom_call.1} parent=1 // pred_check
      _
    $region19: #{tpu_custom_call.1} parent=1 // pred_check_branch
      %55 = sbr.rel (0) target = $region21
    $region20: #{tpu_custom_call.1} parent=1 // pred_region
      _
    $region21: #{tpu_custom_call.1} parent=1 // pred_fallthru
      _
    // Predicated region
    $region22: #{tpu_custom_call.1} parent=1 // pred_check
      _
    $region23: #{tpu_custom_call.1} parent=1 // pred_check_branch
      %57 = sbr.rel (0) target = $region25
    $region24: #{tpu_custom_call.1} parent=1 // pred_region
      %s59 = ssub.s32 1024, 1024
      %60 = vsyncadd [#allocation9], %s59
      %s61 = sshll.u32 [#allocation8], 4
      %s62 = int_to_ptr.vmem [resolvable:$true] %s61
      %67 = dma.hbm_to_vmem [thread:$0]  %s5, 1024, %s62, [#allocation9], 64, 64, 4
    $region25: #{tpu_custom_call.1} parent=1 // pred_fallthru
      _
    // Predicated region
    $region26: #{tpu_custom_call.1} parent=1 // pred_check
      _
    $region27: #{tpu_custom_call.1} parent=1 // pred_check_branch
      %69 = sbr.rel (0) target = $region29
    $region28: #{tpu_custom_call.1} parent=1 // pred_region
      _
    $region29: #{tpu_custom_call.1} parent=1 // pred_fallthru
      _
    // Predicated region
    $region30: #{tpu_custom_call.1} parent=1 // pred_check
      _
    $region31: #{tpu_custom_call.1} parent=1 // pred_check_branch
      %71 = sbr.rel (0) target = $region33
    $region32: #{tpu_custom_call.1} parent=1 // pred_region
      %72 = dma.done [#allocation3], 128
    $region33: #{tpu_custom_call.1} parent=1 // pred_fallthru
      _
    // Predicated region
    $region34: #{tpu_custom_call.1} parent=1 // pred_check
      _
    $region35: #{tpu_custom_call.1} parent=1 // pred_check_branch
      %74 = sbr.rel (0) target = $region37
    $region36: #{tpu_custom_call.1} parent=1 // pred_region
      %75 = dma.done [#allocation6], 1024
    $region37: #{tpu_custom_call.1} parent=1 // pred_fallthru
      _
    // Predicated region
    $region38: #{tpu_custom_call.1} parent=1 // pred_check
      _
    $region39: #{tpu_custom_call.1} parent=1 // pred_check_branch
      %77 = sbr.rel (0) target = $region41
    $region40: #{tpu_custom_call.1} parent=1 // pred_region
      %78 = dma.done [#allocation6], 1024
    $region41: #{tpu_custom_call.1} parent=1 // pred_fallthru
      _
    // Predicated region
    $region42: #{tpu_custom_call.1} parent=1 // pred_check
      _
    $region43: #{tpu_custom_call.1} parent=1 // pred_check_branch
      %80 = sbr.rel (0) target = $region45
    $region44: #{tpu_custom_call.1} parent=1 // pred_region
      %81 = dma.done [#allocation9], 1024
    $region45: #{tpu_custom_call.1} parent=1 // pred_fallthru
      _
    %v83 = vld [vmem:[#allocation2] sm:$0xf]
    %v84 = vld [vmem:[#allocation2 + $0x4] sm:$0xf]
    %v85 = vld [vmem:[#allocation5] sm:$0xf]
    %v86 = vld [vmem:[#allocation5 + $0x4] sm:$0xf]
    %v87 = vld [vmem:[#allocation5 + $0x8] sm:$0xf]
    %v88 = vld [vmem:[#allocation5 + $0xc] sm:$0xf]
    %v89 = vld [vmem:[#allocation5 + $0x10] sm:$0xf]
    %v90 = vld [vmem:[#allocation5 + $0x14] sm:$0xf]
    %v91 = vld [vmem:[#allocation5 + $0x18] sm:$0xf]
    %v92 = vld [vmem:[#allocation5 + $0x1c] sm:$0xf]
    %v93 = vld [vmem:[#allocation5 + $0x20] sm:$0xf]
    %v94 = vld [vmem:[#allocation5 + $0x24] sm:$0xf]
    %v95 = vld [vmem:[#allocation5 + $0x28] sm:$0xf]
    %v96 = vld [vmem:[#allocation5 + $0x2c] sm:$0xf]
    %v97 = vld [vmem:[#allocation5 + $0x30] sm:$0xf]
    %v98 = vld [vmem:[#allocation5 + $0x34] sm:$0xf]
    %v99 = vld [vmem:[#allocation5 + $0x38] sm:$0xf]
    %v100 = vld [vmem:[#allocation5 + $0x3c] sm:$0xf]
    %v101 = vld [vmem:[%s2] sm:$0x1]
    %v103 = vlaneseq
    %v104 = vshrl.u32 %v103, 7
    %v105 = vsub.s32 0, %v104
    %v106 = vrot.slane %v101, %v105
    %v110 = vunpack.c.l.b16 %v83
    %v111 = vunpack.c.l.b16 %v84
    %v112 = vpack.c.b16 %v111, %v110
    %v130 = vunpack.c.l.b16 %v85
    %v131 = vunpack.c.l.b16 %v86
    %v132 = vunpack.c.l.b16 %v87
    %v133 = vunpack.c.l.b16 %v88
    %v134 = vunpack.c.l.b16 %v89
    %v135 = vunpack.c.l.b16 %v90
    %v136 = vunpack.c.l.b16 %v91
    %v137 = vunpack.c.l.b16 %v92
    %v138 = vunpack.c.l.b16 %v93
    %v139 = vunpack.c.l.b16 %v94
    %v140 = vunpack.c.l.b16 %v95
    %v141 = vunpack.c.l.b16 %v96
    %v142 = vunpack.c.l.b16 %v97
    %v143 = vunpack.c.l.b16 %v98
    %v144 = vunpack.c.l.b16 %v99
    %v145 = vunpack.c.l.b16 %v100
    %v146 = vpack.c.b16 %v131, %v130
    %v147 = vpack.c.b16 %v133, %v132
    %v148 = vpack.c.b16 %v135, %v134
    %v149 = vpack.c.b16 %v137, %v136
    %v150 = vpack.c.b16 %v139, %v138
    %v151 = vpack.c.b16 %v141, %v140
    %v152 = vpack.c.b16 %v143, %v142
    %v153 = vpack.c.b16 %v145, %v144
    %162 = vmatprep.subr.bf16.mxu0 0
    %163 = vmatpush1.bf16.msra.mxu0 %v146
    %164 = vmatprep.subr.bf16.mxu0 0
    %165 = vmatpush1.bf16.msra.mxu0 %v147
    %166 = vmatprep.subr.bf16.mxu0 0
    %167 = vmatpush1.bf16.msra.mxu0 %v148
    %168 = vmatprep.subr.bf16.mxu0 0
    %169 = vmatpush1.bf16.msra.mxu0 %v149
    %170 = vmatprep.subr.bf16.mxu0 0
    %171 = vmatpush1.bf16.msra.mxu0 %v150
    %172 = vmatprep.subr.bf16.mxu0 0
    %173 = vmatpush1.bf16.msra.mxu0 %v151
    %174 = vmatprep.subr.bf16.mxu0 0
    %175 = vmatpush1.bf16.msra.mxu0 %v152
    %176 = vmatprep.subr.bf16.mxu0 0
    %177 = vmatpush1.bf16.msra.mxu0 %v153
    %178 = vmatprep.subr.bf16.mxu0 0
    %179 = vmatpush1.bf16.msra.mxu0 0
    %180 = vmatprep.subr.bf16.mxu0 0
    %181 = vmatpush1.bf16.msra.mxu0 0
    %182 = vmatprep.subr.bf16.mxu0 0
    %183 = vmatpush1.bf16.msra.mxu0 0
    %184 = vmatprep.subr.bf16.mxu0 0
    %185 = vmatpush1.bf16.msra.mxu0 0
    %186 = vmatprep.subr.bf16.mxu0 0
    %187 = vmatpush1.bf16.msra.mxu0 0
    %188 = vmatprep.subr.bf16.mxu0 0
    %189 = vmatpush1.bf16.msra.mxu0 0
    %190 = vmatprep.subr.bf16.mxu0 0
    %191 = vmatpush1.bf16.msra.mxu0 0
    %192 = vmatprep.subr.bf16.mxu0 0
    %193 = vmatpush1.bf16.msra.mxu0 0
    %194 = vmatprep.mubr.bf16.mxu0 0
    %195 = vmatmul.mubr.bf16.gmra.mrb[0].mxu0 %v112
    %v196 = vpop.f32.mrb[0].mxu0
    %v197 = vadd.f32 %v106, %v196
    %v198 = vpop.f32.mrb[0].mxu0
    %v199 = vpop.f32.mrb[0].mxu0
    %v200 = vadd.f32 %v106, %v199
    %v201 = vpop.f32.mrb[0].mxu0
    %202 = vdwg.mxu0
    %v203 = vmax.f32 %v197, 0.0
    %v204 = vmax.f32 %v200, 0.0
    %v205 = vpack.c.bf16 %v204, %v203
    %v206 = vld [vmem:[#allocation7] sm:$0xf]
    %v207 = vld [vmem:[#allocation7 + $0x4] sm:$0xf]
    %v208 = vld [vmem:[#allocation7 + $0x8] sm:$0xf]
    %v209 = vld [vmem:[#allocation7 + $0xc] sm:$0xf]
    %v210 = vld [vmem:[#allocation7 + $0x10] sm:$0xf]
    %v211 = vld [vmem:[#allocation7 + $0x14] sm:$0xf]
    %v212 = vld [vmem:[#allocation7 + $0x18] sm:$0xf]
    %v213 = vld [vmem:[#allocation7 + $0x1c] sm:$0xf]
    %v214 = vld [vmem:[#allocation7 + $0x20] sm:$0xf]
    %v215 = vld [vmem:[#allocation7 + $0x24] sm:$0xf]
    %v216 = vld [vmem:[#allocation7 + $0x28] sm:$0xf]
    %v217 = vld [vmem:[#allocation7 + $0x2c] sm:$0xf]
    %v218 = vld [vmem:[#allocation7 + $0x30] sm:$0xf]
    %v219 = vld [vmem:[#allocation7 + $0x34] sm:$0xf]
    %v220 = vld [vmem:[#allocation7 + $0x38] sm:$0xf]
    %v221 = vld [vmem:[#allocation7 + $0x3c] sm:$0xf]
    %v222 = vld [vmem:[%s4] sm:$0x1]
    %v224 = vlaneseq
    %v225 = vshrl.u32 %v224, 7
    %v226 = vsub.s32 0, %v225
    %v227 = vrot.slane %v222, %v226
    %v245 = vunpack.c.l.b16 %v206
    %v246 = vunpack.c.l.b16 %v207
    %v247 = vunpack.c.l.b16 %v208
    %v248 = vunpack.c.l.b16 %v209
    %v249 = vunpack.c.l.b16 %v210
    %v250 = vunpack.c.l.b16 %v211
    %v251 = vunpack.c.l.b16 %v212
    %v252 = vunpack.c.l.b16 %v213
    %v253 = vunpack.c.l.b16 %v214
    %v254 = vunpack.c.l.b16 %v215
    %v255 = vunpack.c.l.b16 %v216
    %v256 = vunpack.c.l.b16 %v217
    %v257 = vunpack.c.l.b16 %v218
    %v258 = vunpack.c.l.b16 %v219
    %v259 = vunpack.c.l.b16 %v220
    %v260 = vunpack.c.l.b16 %v221
    %v261 = vpack.c.b16 %v246, %v245
    %v262 = vpack.c.b16 %v248, %v247
    %v263 = vpack.c.b16 %v250, %v249
    %v264 = vpack.c.b16 %v252, %v251
    %v265 = vpack.c.b16 %v254, %v253
    %v266 = vpack.c.b16 %v256, %v255
    %v267 = vpack.c.b16 %v258, %v257
    %v268 = vpack.c.b16 %v260, %v259
    %277 = vmatprep.subr.bf16.mxu0 0
    %278 = vmatpush1.bf16.msra.mxu0 %v261
    %279 = vmatprep.subr.bf16.mxu0 0
    %280 = vmatpush1.bf16.msra.mxu0 %v262
    %281 = vmatprep.subr.bf16.mxu0 0
    %282 = vmatpush1.bf16.msra.mxu0 %v263
    %283 = vmatprep.subr.bf16.mxu0 0
    %284 = vmatpush1.bf16.msra.mxu0 %v264
    %285 = vmatprep.subr.bf16.mxu0 0
    %286 = vmatpush1.bf16.msra.mxu0 %v265
    %287 = vmatprep.subr.bf16.mxu0 0
    %288 = vmatpush1.bf16.msra.mxu0 %v266
    %289 = vmatprep.subr.bf16.mxu0 0
    %290 = vmatpush1.bf16.msra.mxu0 %v267
    %291 = vmatprep.subr.bf16.mxu0 0
    %292 = vmatpush1.bf16.msra.mxu0 %v268
    %293 = vmatprep.subr.bf16.mxu0 0
    %294 = vmatpush1.bf16.msra.mxu0 0
    %295 = vmatprep.subr.bf16.mxu0 0
    %296 = vmatpush1.bf16.msra.mxu0 0
    %297 = vmatprep.subr.bf16.mxu0 0
    %298 = vmatpush1.bf16.msra.mxu0 0
    %299 = vmatprep.subr.bf16.mxu0 0
    %300 = vmatpush1.bf16.msra.mxu0 0
    %301 = vmatprep.subr.bf16.mxu0 0
    %302 = vmatpush1.bf16.msra.mxu0 0
    %303 = vmatprep.subr.bf16.mxu0 0
    %304 = vmatpush1.bf16.msra.mxu0 0
    %305 = vmatprep.subr.bf16.mxu0 0
    %306 = vmatpush1.bf16.msra.mxu0 0
    %307 = vmatprep.subr.bf16.mxu0 0
    %308 = vmatpush1.bf16.msra.mxu0 0
    %309 = vmatprep.mubr.bf16.mxu0 0
    %310 = vmatmul.mubr.bf16.gmra.mrb[0].mxu0 %v205
    %v311 = vpop.f32.mrb[0].mxu0
    %v312 = vadd.f32 %v227, %v311
    %v313 = vpop.f32.mrb[0].mxu0
    %v314 = vpop.f32.mrb[0].mxu0
    %v315 = vadd.f32 %v227, %v314
    %v316 = vpop.f32.mrb[0].mxu0
    %317 = vdwg.mxu0
    %v318 = vmax.f32 %v312, 0.0
    %v319 = vmax.f32 %v315, 0.0
    %v320 = vpack.c.bf16 %v319, %v318
    %v321 = vld [vmem:[#allocation8] sm:$0xf]
    %v322 = vld [vmem:[#allocation8 + $0x4] sm:$0xf]
    %v323 = vld [vmem:[#allocation8 + $0x8] sm:$0xf]
    %v324 = vld [vmem:[#allocation8 + $0xc] sm:$0xf]
    %v325 = vld [vmem:[#allocation8 + $0x10] sm:$0xf]
    %v326 = vld [vmem:[#allocation8 + $0x14] sm:$0xf]
    %v327 = vld [vmem:[#allocation8 + $0x18] sm:$0xf]
    %v328 = vld [vmem:[#allocation8 + $0x1c] sm:$0xf]
    %v329 = vld [vmem:[#allocation8 + $0x20] sm:$0xf]
    %v330 = vld [vmem:[#allocation8 + $0x24] sm:$0xf]
    %v331 = vld [vmem:[#allocation8 + $0x28] sm:$0xf]
    %v332 = vld [vmem:[#allocation8 + $0x2c] sm:$0xf]
    %v333 = vld [vmem:[#allocation8 + $0x30] sm:$0xf]
    %v334 = vld [vmem:[#allocation8 + $0x34] sm:$0xf]
    %v335 = vld [vmem:[#allocation8 + $0x38] sm:$0xf]
    %v336 = vld [vmem:[#allocation8 + $0x3c] sm:$0xf]
    %v337 = vld [vmem:[%s6] sm:$0x1]
    %v339 = vlaneseq
    %v340 = vshrl.u32 %v339, 7
    %v341 = vsub.s32 0, %v340
    %v342 = vrot.slane %v337, %v341
    %v360 = vunpack.c.l.b16 %v321
    %v361 = vunpack.c.l.b16 %v322
    %v362 = vunpack.c.l.b16 %v323
    %v363 = vunpack.c.l.b16 %v324
    %v364 = vunpack.c.l.b16 %v325
    %v365 = vunpack.c.l.b16 %v326
    %v366 = vunpack.c.l.b16 %v327
    %v367 = vunpack.c.l.b16 %v328
    %v368 = vunpack.c.l.b16 %v329
    %v369 = vunpack.c.l.b16 %v330
    %v370 = vunpack.c.l.b16 %v331
    %v371 = vunpack.c.l.b16 %v332
    %v372 = vunpack.c.l.b16 %v333
    %v373 = vunpack.c.l.b16 %v334
    %v374 = vunpack.c.l.b16 %v335
    %v375 = vunpack.c.l.b16 %v336
    %v376 = vpack.c.b16 %v361, %v360
    %v377 = vpack.c.b16 %v363, %v362
    %v378 = vpack.c.b16 %v365, %v364
    %v379 = vpack.c.b16 %v367, %v366
    %v380 = vpack.c.b16 %v369, %v368
    %v381 = vpack.c.b16 %v371, %v370
    %v382 = vpack.c.b16 %v373, %v372
    %v383 = vpack.c.b16 %v375, %v374
    %392 = vmatprep.subr.bf16.mxu0 0
    %393 = vmatpush1.bf16.msra.mxu0 %v376
    %394 = vmatprep.subr.bf16.mxu0 0
    %395 = vmatpush1.bf16.msra.mxu0 %v377
    %396 = vmatprep.subr.bf16.mxu0 0
    %397 = vmatpush1.bf16.msra.mxu0 %v378
    %398 = vmatprep.subr.bf16.mxu0 0
    %399 = vmatpush1.bf16.msra.mxu0 %v379
    %400 = vmatprep.subr.bf16.mxu0 0
    %401 = vmatpush1.bf16.msra.mxu0 %v380
    %402 = vmatprep.subr.bf16.mxu0 0
    %403 = vmatpush1.bf16.msra.mxu0 %v381
    %404 = vmatprep.subr.bf16.mxu0 0
    %405 = vmatpush1.bf16.msra.mxu0 %v382
    %406 = vmatprep.subr.bf16.mxu0 0
    %407 = vmatpush1.bf16.msra.mxu0 %v383
    %408 = vmatprep.subr.bf16.mxu0 0
    %409 = vmatpush1.bf16.msra.mxu0 0
    %410 = vmatprep.subr.bf16.mxu0 0
    %411 = vmatpush1.bf16.msra.mxu0 0
    %412 = vmatprep.subr.bf16.mxu0 0
    %413 = vmatpush1.bf16.msra.mxu0 0
    %414 = vmatprep.subr.bf16.mxu0 0
    %415 = vmatpush1.bf16.msra.mxu0 0
    %416 = vmatprep.subr.bf16.mxu0 0
    %417 = vmatpush1.bf16.msra.mxu0 0
    %418 = vmatprep.subr.bf16.mxu0 0
    %419 = vmatpush1.bf16.msra.mxu0 0
    %420 = vmatprep.subr.bf16.mxu0 0
    %421 = vmatpush1.bf16.msra.mxu0 0
    %422 = vmatprep.subr.bf16.mxu0 0
    %423 = vmatpush1.bf16.msra.mxu0 0
    %424 = vmatprep.mubr.bf16.mxu0 0
    %425 = vmatmul.mubr.bf16.gmra.mrb[0].mxu0 %v320
    %v426 = vpop.f32.mrb[0].mxu0
    %v427 = vadd.f32 %v342, %v426
    %v428 = vpop.f32.mrb[0].mxu0
    %v429 = vpop.f32.mrb[0].mxu0
    %v430 = vadd.f32 %v342, %v429
    %v431 = vpop.f32.mrb[0].mxu0
    %432 = vdwg.mxu0
    %433 = vst [vmem:[#allocation10] sm:$0xff] %v427
    %434 = vst [vmem:[#allocation10 + $0x8] sm:$0xff] %v430
    // Predicated region
    $region46: #{tpu_custom_call.1} parent=1 // pred_check
      _
    $region47: #{tpu_custom_call.1} parent=1 // pred_check_branch
      %436 = sbr.rel (0) target = $region49
    $region48: #{tpu_custom_call.1} parent=1 // pred_region
      %s438 = ssub.s32 256, 256
      %439 = vsyncadd [#allocation4], %s438
      %s440 = sshll.u32 [#allocation10], 4
      %s441 = int_to_ptr.vmem [resolvable:$true] %s440
      %446 = dma.vmem_to_hbm [thread:$0]  %s441, 256, %s7, [#allocation4], 128, 128, 8
    $region49: #{tpu_custom_call.1} parent=1 // pred_fallthru
      _
    // Predicated region
    $region50: #{tpu_custom_call.1} parent=1 // pred_check
      _
    $region51: #{tpu_custom_call.1} parent=1 // pred_check_branch
      %448 = sbr.rel (0) target = $region53
    $region52: #{tpu_custom_call.1} parent=1 // pred_region
      %449 = dma.done [#allocation4], 256
    $region53: #{tpu_custom_call.1} parent=1 // pred_fallthru
      _
    %450 = vsyncpa [#allocation3], 1
    %451 = vsyncpa [#allocation6], 1
    %452 = vsyncpa [#allocation9], 1
    %453 = vsyncpa [#allocation4], 1

// kernel: tpu_custom_call.1
$region0: #{tpu_custom_call.1}
  #allocation0 [shape = 'u32[]', space=smem, size = 0x4, offset = 0x4, fixed_abs, tag = 'smem constant byte address 0x4 - core index']
  #allocation1 [shape = 'u32[144,128]{1,0:T(1,128)}', space=vmem, size = 0x12000, scoped, tag = 'internal scratch']
  %s0 = inlined_call_operand.hbm [shape: bf16[16,128], index: 0, kind: input, shape index: {}]
  %s1 = inlined_call_operand.hbm [shape: bf16[128,128], index: 1, kind: input, shape index: {}]
  %s2 = inlined_call_operand.vmem [shape: f32[1,128], index: 2, kind: input, shape index: {}]
  %s3 = inlined_call_operand.hbm [shape: bf16[128,128], index: 3, kind: input, shape index: {}]
  %s4 = inlined_call_operand.vmem [shape: f32[1,128], index: 4, kind: input, shape index: {}]
  %s5 = inlined_call_operand.hbm [shape: bf16[128,128], index: 5, kind: input, shape index: {}]
  %s6 = inlined_call_operand.vmem [shape: f32[1,128], index: 6, kind: input, shape index: {}]
  %s7 = inlined_call_operand.hbm [shape: f32[16,128], index: 7, kind: output, shape index: {}]
  %s8 = sld [smem:[#allocation0]]
  $region54: #{tpu_custom_call.1} parent=0
    _
  %s10 = ssub.s32 1, %s8
  %s11 = scalar_select 0, %s10, %s8
  $region1: #{tpu_custom_call.1} parent=0
    #allocation2 [shape = 'u8[4096]{0}', space=vmem, size = 0x1000, scoped, tag = 'input window, operand 0, single buffered']
    #allocation3 [shape = 's32[1]{0}', space=sflag, size = 0x4, scoped, tag = 'scoped memory for tpu_custom_call.1']
    #allocation4 [shape = 's32[1]{0}', space=sflag, size = 0x4, scoped, tag = 'scoped memory for tpu_custom_call.1']
    #allocation5 [shape = 'u8[32768]{0}', space=vmem, size = 0x8000, scoped, tag = 'input window, operand 1, single buffered']
    #allocation6 [shape = 's32[1]{0}', space=sflag, size = 0x4, scoped, tag = 'scoped memory for tpu_custom_call.1']
    #allocation7 [shape = 'u8[32768]{0}', space=vmem, size = 0x8000, scoped, tag = 'input window, operand 3, single buffered']
    #allocation8 [shape = 'u8[32768]{0}', space=vmem, size = 0x8000, scoped, tag = 'input window, operand 5, single buffered']
    #allocation9 [shape = 's32[1]{0}', space=sflag, size = 0x4, scoped, tag = 'scoped memory for tpu_custom_call.1']
    #allocation10 [shape = 'u8[8192]{0}', space=vmem, size = 0x2000, scoped, tag = 'output window, operand 0, single buffered']
    %12 = vsyncpa [#allocation3], 0
    %13 = vsyncpa [#allocation6], 0
    %14 = vsyncpa [#allocation9], 0
    %15 = vsyncpa [#allocation4], 0
    // Predicated region
    $region2: #{tpu_custom_call.1} parent=1 // pred_check
      _
    $region3: #{tpu_custom_call.1} parent=1 // pred_check_branch
      %17 = sbr.rel (0) target = $region5
    $region4: #{tpu_custom_call.1} parent=1 // pred_region
      %s19 = ssub.s32 128, 128
      %20 = vsyncadd [#allocation3], %s19
      %s21 = sshll.u32 [#allocation2], 4
      %s22 = int_to_ptr.vmem [resolvable:$true] %s21
      %27 = dma.hbm_to_vmem [thread:$0]  %s0, 128, %s22, [#allocation3], 64, 64, 4
    $region5: #{tpu_custom_call.1} parent=1 // pred_fallthru
      _
    // Predicated region
    $region6: #{tpu_custom_call.1} parent=1 // pred_check
      _
    $region7: #{tpu_custom_call.1} parent=1 // pred_check_branch
      %29 = sbr.rel (0) target = $region9
    $region8: #{tpu_custom_call.1} parent=1 // pred_region
      %s31 = ssub.s32 1024, 1024
      %32 = vsyncadd [#allocation6], %s31
      %s33 = sshll.u32 [#allocation5], 4
      %s34 = int_to_ptr.vmem [resolvable:$true] %s33
      %39 = dma.hbm_to_vmem [thread:$0]  %s1, 1024, %s34, [#allocation6], 64, 64, 4
    $region9: #{tpu_custom_call.1} parent=1 // pred_fallthru
      _
    // Predicated region
    $region10: #{tpu_custom_call.1} parent=1 // pred_check
      _
    $region11: #{tpu_custom_call.1} parent=1 // pred_check_branch
      %41 = sbr.rel (0) target = $region13
    $region12: #{tpu_custom_call.1} parent=1 // pred_region
      _
    $region13: #{tpu_custom_call.1} parent=1 // pred_fallthru
      _
    // Predicated region
    $region14: #{tpu_custom_call.1} parent=1 // pred_check
      _
    $region15: #{tpu_custom_call.1} parent=1 // pred_check_branch
      %43 = sbr.rel (0) target = $region17
    $region16: #{tpu_custom_call.1} parent=1 // pred_region
      %s45 = ssub.s32 1024, 1024
      %46 = vsyncadd [#allocation6], %s45
      %s47 = sshll.u32 [#allocation7], 4
      %s48 = int_to_ptr.vmem [resolvable:$true] %s47
      %53 = dma.hbm_to_vmem [thread:$0]  %s3, 1024, %s48, [#allocation6], 64, 64, 4
    $region17: #{tpu_custom_call.1} parent=1 // pred_fallthru
      _
    // Predicated region
    $region18: #{tpu_custom_call.1} parent=1 // pred_check
      _
    $region19: #{tpu_custom_call.1} parent=1 // pred_check_branch
      %55 = sbr.rel (0) target = $region21
    $region20: #{tpu_custom_call.1} parent=1 // pred_region
      _
    $region21: #{tpu_custom_call.1} parent=1 // pred_fallthru
      _
    // Predicated region
    $region22: #{tpu_custom_call.1} parent=1 // pred_check
      _
    $region23: #{tpu_custom_call.1} parent=1 // pred_check_branch
      %57 = sbr.rel (0) target = $region25
    $region24: #{tpu_custom_call.1} parent=1 // pred_region
      %s59 = ssub.s32 1024, 1024
      %60 = vsyncadd [#allocation9], %s59
      %s61 = sshll.u32 [#allocation8], 4
      %s62 = int_to_ptr.vmem [resolvable:$true] %s61
      %67 = dma.hbm_to_vmem [thread:$0]  %s5, 1024, %s62, [#allocation9], 64, 64, 4
    $region25: #{tpu_custom_call.1} parent=1 // pred_fallthru
      _
    // Predicated region
    $region26: #{tpu_custom_call.1} parent=1 // pred_check
      _
    $region27: #{tpu_custom_call.1} parent=1 // pred_check_branch
      %69 = sbr.rel (0) target = $region29
    $region28: #{tpu_custom_call.1} parent=1 // pred_region
      _
    $region29: #{tpu_custom_call.1} parent=1 // pred_fallthru
      _
    // Predicated region
    $region30: #{tpu_custom_call.1} parent=1 // pred_check
      _
    $region31: #{tpu_custom_call.1} parent=1 // pred_check_branch
      %71 = sbr.rel (0) target = $region33
    $region32: #{tpu_custom_call.1} parent=1 // pred_region
      %72 = dma.done [#allocation3], 128
    $region33: #{tpu_custom_call.1} parent=1 // pred_fallthru
      _
    // Predicated region
    $region34: #{tpu_custom_call.1} parent=1 // pred_check
      _
    $region35: #{tpu_custom_call.1} parent=1 // pred_check_branch
      %74 = sbr.rel (0) target = $region37
    $region36: #{tpu_custom_call.1} parent=1 // pred_region
      %75 = dma.done [#allocation6], 1024
    $region37: #{tpu_custom_call.1} parent=1 // pred_fallthru
      _
    // Predicated region
    $region38: #{tpu_custom_call.1} parent=1 // pred_check
      _
    $region39: #{tpu_custom_call.1} parent=1 // pred_check_branch
      %77 = sbr.rel (0) target = $region41
    $region40: #{tpu_custom_call.1} parent=1 // pred_region
      %78 = dma.done [#allocation6], 1024
    $region41: #{tpu_custom_call.1} parent=1 // pred_fallthru
      _
    // Predicated region
    $region42: #{tpu_custom_call.1} parent=1 // pred_check
      _
    $region43: #{tpu_custom_call.1} parent=1 // pred_check_branch
      %80 = sbr.rel (0) target = $region45
    $region44: #{tpu_custom_call.1} parent=1 // pred_region
      %81 = dma.done [#allocation9], 1024
    $region45: #{tpu_custom_call.1} parent=1 // pred_fallthru
      _
    %v83 = vld [vmem:[#allocation2] sm:$0xf]
    %v84 = vld [vmem:[#allocation2 + $0x4] sm:$0xf]
    %v85 = vld [vmem:[#allocation5] sm:$0xf]
    %v86 = vld [vmem:[#allocation5 + $0x4] sm:$0xf]
    %v87 = vld [vmem:[#allocation5 + $0x8] sm:$0xf]
    %v88 = vld [vmem:[#allocation5 + $0xc] sm:$0xf]
    %v89 = vld [vmem:[#allocation5 + $0x10] sm:$0xf]
    %v90 = vld [vmem:[#allocation5 + $0x14] sm:$0xf]
    %v91 = vld [vmem:[#allocation5 + $0x18] sm:$0xf]
    %v92 = vld [vmem:[#allocation5 + $0x1c] sm:$0xf]
    %v93 = vld [vmem:[#allocation5 + $0x20] sm:$0xf]
    %v94 = vld [vmem:[#allocation5 + $0x24] sm:$0xf]
    %v95 = vld [vmem:[#allocation5 + $0x28] sm:$0xf]
    %v96 = vld [vmem:[#allocation5 + $0x2c] sm:$0xf]
    %v97 = vld [vmem:[#allocation5 + $0x30] sm:$0xf]
    %v98 = vld [vmem:[#allocation5 + $0x34] sm:$0xf]
    %v99 = vld [vmem:[#allocation5 + $0x38] sm:$0xf]
    %v100 = vld [vmem:[#allocation5 + $0x3c] sm:$0xf]
    %v101 = vld [vmem:[%s2] sm:$0x1]
    %v103 = vlaneseq
    %v104 = vshrl.u32 %v103, 7
    %v105 = vsub.s32 0, %v104
    %v106 = vrot.slane %v101, %v105
    %v110 = vunpack.c.l.b16 %v83
    %v111 = vunpack.c.l.b16 %v84
    %v112 = vpack.c.b16 %v111, %v110
    %v130 = vunpack.c.l.b16 %v85
    %v131 = vunpack.c.l.b16 %v86
    %v132 = vunpack.c.l.b16 %v87
    %v133 = vunpack.c.l.b16 %v88
    %v134 = vunpack.c.l.b16 %v89
    %v135 = vunpack.c.l.b16 %v90
    %v136 = vunpack.c.l.b16 %v91
    %v137 = vunpack.c.l.b16 %v92
    %v138 = vunpack.c.l.b16 %v93
    %v139 = vunpack.c.l.b16 %v94
    %v140 = vunpack.c.l.b16 %v95
    %v141 = vunpack.c.l.b16 %v96
    %v142 = vunpack.c.l.b16 %v97
    %v143 = vunpack.c.l.b16 %v98
    %v144 = vunpack.c.l.b16 %v99
    %v145 = vunpack.c.l.b16 %v100
    %v146 = vpack.c.b16 %v131, %v130
    %v147 = vpack.c.b16 %v133, %v132
    %v148 = vpack.c.b16 %v135, %v134
    %v149 = vpack.c.b16 %v137, %v136
    %v150 = vpack.c.b16 %v139, %v138
    %v151 = vpack.c.b16 %v141, %v140
    %v152 = vpack.c.b16 %v143, %v142
    %v153 = vpack.c.b16 %v145, %v144
    %162 = vmatprep.subr.bf16.mxu0 0
    %163 = vmatpush1.bf16.msra.mxu0 %v146
    %164 = vmatprep.subr.bf16.mxu0 0
    %165 = vmatpush1.bf16.msra.mxu0 %v147
    %166 = vmatprep.subr.bf16.mxu0 0
    %167 = vmatpush1.bf16.msra.mxu0 %v148
    %168 = vmatprep.subr.bf16.mxu0 0
    %169 = vmatpush1.bf16.msra.mxu0 %v149
    %170 = vmatprep.subr.bf16.mxu0 0
    %171 = vmatpush1.bf16.msra.mxu0 %v150
    %172 = vmatprep.subr.bf16.mxu0 0
    %173 = vmatpush1.bf16.msra.mxu0 %v151
    %174 = vmatprep.subr.bf16.mxu0 0
    %175 = vmatpush1.bf16.msra.mxu0 %v152
    %176 = vmatprep.subr.bf16.mxu0 0
    %177 = vmatpush1.bf16.msra.mxu0 %v153
    %178 = vmatprep.subr.bf16.mxu0 0
    %179 = vmatpush1.bf16.msra.mxu0 0
    %180 = vmatprep.subr.bf16.mxu0 0
    %181 = vmatpush1.bf16.msra.mxu0 0
    %182 = vmatprep.subr.bf16.mxu0 0
    %183 = vmatpush1.bf16.msra.mxu0 0
    %184 = vmatprep.subr.bf16.mxu0 0
    %185 = vmatpush1.bf16.msra.mxu0 0
    %186 = vmatprep.subr.bf16.mxu0 0
    %187 = vmatpush1.bf16.msra.mxu0 0
    %188 = vmatprep.subr.bf16.mxu0 0
    %189 = vmatpush1.bf16.msra.mxu0 0
    %190 = vmatprep.subr.bf16.mxu0 0
    %191 = vmatpush1.bf16.msra.mxu0 0
    %192 = vmatprep.subr.bf16.mxu0 0
    %193 = vmatpush1.bf16.msra.mxu0 0
    %194 = vmatprep.mubr.bf16.mxu0 0
    %195 = vmatmul.mubr.bf16.gmra.mrb[0].mxu0 %v112
    %v196 = vpop.f32.mrb[0].mxu0
    %v197 = vadd.f32 %v106, %v196
    %v198 = vpop.f32.mrb[0].mxu0
    %v199 = vpop.f32.mrb[0].mxu0
    %v200 = vadd.f32 %v106, %v199
    %v201 = vpop.f32.mrb[0].mxu0
    %202 = vdwg.mxu0
    %v203 = vmax.f32 %v197, 0.0
    %v204 = vmax.f32 %v200, 0.0
    %v205 = vpack.c.bf16 %v204, %v203
    %v206 = vld [vmem:[#allocation7] sm:$0xf]
    %v207 = vld [vmem:[#allocation7 + $0x4] sm:$0xf]
    %v208 = vld [vmem:[#allocation7 + $0x8] sm:$0xf]
    %v209 = vld [vmem:[#allocation7 + $0xc] sm:$0xf]
    %v210 = vld [vmem:[#allocation7 + $0x10] sm:$0xf]
    %v211 = vld [vmem:[#allocation7 + $0x14] sm:$0xf]
    %v212 = vld [vmem:[#allocation7 + $0x18] sm:$0xf]
    %v213 = vld [vmem:[#allocation7 + $0x1c] sm:$0xf]
    %v214 = vld [vmem:[#allocation7 + $0x20] sm:$0xf]
    %v215 = vld [vmem:[#allocation7 + $0x24] sm:$0xf]
    %v216 = vld [vmem:[#allocation7 + $0x28] sm:$0xf]
    %v217 = vld [vmem:[#allocation7 + $0x2c] sm:$0xf]
    %v218 = vld [vmem:[#allocation7 + $0x30] sm:$0xf]
    %v219 = vld [vmem:[#allocation7 + $0x34] sm:$0xf]
    %v220 = vld [vmem:[#allocation7 + $0x38] sm:$0xf]
    %v221 = vld [vmem:[#allocation7 + $0x3c] sm:$0xf]
    %v222 = vld [vmem:[%s4] sm:$0x1]
    %v224 = vlaneseq
    %v225 = vshrl.u32 %v224, 7
    %v226 = vsub.s32 0, %v225
    %v227 = vrot.slane %v222, %v226
    %v245 = vunpack.c.l.b16 %v206
    %v246 = vunpack.c.l.b16 %v207
    %v247 = vunpack.c.l.b16 %v208
    %v248 = vunpack.c.l.b16 %v209
    %v249 = vunpack.c.l.b16 %v210
    %v250 = vunpack.c.l.b16 %v211
    %v251 = vunpack.c.l.b16 %v212
    %v252 = vunpack.c.l.b16 %v213
    %v253 = vunpack.c.l.b16 %v214
    %v254 = vunpack.c.l.b16 %v215
    %v255 = vunpack.c.l.b16 %v216
    %v256 = vunpack.c.l.b16 %v217
    %v257 = vunpack.c.l.b16 %v218
    %v258 = vunpack.c.l.b16 %v219
    %v259 = vunpack.c.l.b16 %v220
    %v260 = vunpack.c.l.b16 %v221
    %v261 = vpack.c.b16 %v246, %v245
    %v262 = vpack.c.b16 %v248, %v247
    %v263 = vpack.c.b16 %v250, %v249
    %v264 = vpack.c.b16 %v252, %v251
    %v265 = vpack.c.b16 %v254, %v253
    %v266 = vpack.c.b16 %v256, %v255
    %v267 = vpack.c.b16 %v258, %v257
    %v268 = vpack.c.b16 %v260, %v259
    %277 = vmatprep.subr.bf16.mxu0 0
    %278 = vmatpush1.bf16.msra.mxu0 %v261
    %279 = vmatprep.subr.bf16.mxu0 0
    %280 = vmatpush1.bf16.msra.mxu0 %v262
    %281 = vmatprep.subr.bf16.mxu0 0
    %282 = vmatpush1.bf16.msra.mxu0 %v263
    %283 = vmatprep.subr.bf16.mxu0 0
    %284 = vmatpush1.bf16.msra.mxu0 %v264
    %285 = vmatprep.subr.bf16.mxu0 0
    %286 = vmatpush1.bf16.msra.mxu0 %v265
    %287 = vmatprep.subr.bf16.mxu0 0
    %288 = vmatpush1.bf16.msra.mxu0 %v266
    %289 = vmatprep.subr.bf16.mxu0 0
    %290 = vmatpush1.bf16.msra.mxu0 %v267
    %291 = vmatprep.subr.bf16.mxu0 0
    %292 = vmatpush1.bf16.msra.mxu0 %v268
    %293 = vmatprep.subr.bf16.mxu0 0
    %294 = vmatpush1.bf16.msra.mxu0 0
    %295 = vmatprep.subr.bf16.mxu0 0
    %296 = vmatpush1.bf16.msra.mxu0 0
    %297 = vmatprep.subr.bf16.mxu0 0
    %298 = vmatpush1.bf16.msra.mxu0 0
    %299 = vmatprep.subr.bf16.mxu0 0
    %300 = vmatpush1.bf16.msra.mxu0 0
    %301 = vmatprep.subr.bf16.mxu0 0
    %302 = vmatpush1.bf16.msra.mxu0 0
    %303 = vmatprep.subr.bf16.mxu0 0
    %304 = vmatpush1.bf16.msra.mxu0 0
    %305 = vmatprep.subr.bf16.mxu0 0
    %306 = vmatpush1.bf16.msra.mxu0 0
    %307 = vmatprep.subr.bf16.mxu0 0
    %308 = vmatpush1.bf16.msra.mxu0 0
    %309 = vmatprep.mubr.bf16.mxu0 0
    %310 = vmatmul.mubr.bf16.gmra.mrb[0].mxu0 %v205
    %v311 = vpop.f32.mrb[0].mxu0
    %v312 = vadd.f32 %v227, %v311
    %v313 = vpop.f32.mrb[0].mxu0
    %v314 = vpop.f32.mrb[0].mxu0
    %v315 = vadd.f32 %v227, %v314
    %v316 = vpop.f32.mrb[0].mxu0
    %317 = vdwg.mxu0
    %v318 = vmax.f32 %v312, 0.0
    %v319 = vmax.f32 %v315, 0.0
    %v320 = vpack.c.bf16 %v319, %v318
    %v321 = vld [vmem:[#allocation8] sm:$0xf]
    %v322 = vld [vmem:[#allocation8 + $0x4] sm:$0xf]
    %v323 = vld [vmem:[#allocation8 + $0x8] sm:$0xf]
    %v324 = vld [vmem:[#allocation8 + $0xc] sm:$0xf]
    %v325 = vld [vmem:[#allocation8 + $0x10] sm:$0xf]
    %v326 = vld [vmem:[#allocation8 + $0x14] sm:$0xf]
    %v327 = vld [vmem:[#allocation8 + $0x18] sm:$0xf]
    %v328 = vld [vmem:[#allocation8 + $0x1c] sm:$0xf]
    %v329 = vld [vmem:[#allocation8 + $0x20] sm:$0xf]
    %v330 = vld [vmem:[#allocation8 + $0x24] sm:$0xf]
    %v331 = vld [vmem:[#allocation8 + $0x28] sm:$0xf]
    %v332 = vld [vmem:[#allocation8 + $0x2c] sm:$0xf]
    %v333 = vld [vmem:[#allocation8 + $0x30] sm:$0xf]
    %v334 = vld [vmem:[#allocation8 + $0x34] sm:$0xf]
    %v335 = vld [vmem:[#allocation8 + $0x38] sm:$0xf]
    %v336 = vld [vmem:[#allocation8 + $0x3c] sm:$0xf]
    %v337 = vld [vmem:[%s6] sm:$0x1]
    %v339 = vlaneseq
    %v340 = vshrl.u32 %v339, 7
    %v341 = vsub.s32 0, %v340
    %v342 = vrot.slane %v337, %v341
    %v360 = vunpack.c.l.b16 %v321
    %v361 = vunpack.c.l.b16 %v322
    %v362 = vunpack.c.l.b16 %v323
    %v363 = vunpack.c.l.b16 %v324
    %v364 = vunpack.c.l.b16 %v325
    %v365 = vunpack.c.l.b16 %v326
    %v366 = vunpack.c.l.b16 %v327
    %v367 = vunpack.c.l.b16 %v328
    %v368 = vunpack.c.l.b16 %v329
    %v369 = vunpack.c.l.b16 %v330
    %v370 = vunpack.c.l.b16 %v331
    %v371 = vunpack.c.l.b16 %v332
    %v372 = vunpack.c.l.b16 %v333
    %v373 = vunpack.c.l.b16 %v334
    %v374 = vunpack.c.l.b16 %v335
    %v375 = vunpack.c.l.b16 %v336
    %v376 = vpack.c.b16 %v361, %v360
    %v377 = vpack.c.b16 %v363, %v362
    %v378 = vpack.c.b16 %v365, %v364
    %v379 = vpack.c.b16 %v367, %v366
    %v380 = vpack.c.b16 %v369, %v368
    %v381 = vpack.c.b16 %v371, %v370
    %v382 = vpack.c.b16 %v373, %v372
    %v383 = vpack.c.b16 %v375, %v374
    %392 = vmatprep.subr.bf16.mxu0 0
    %393 = vmatpush1.bf16.msra.mxu0 %v376
    %394 = vmatprep.subr.bf16.mxu0 0
    %395 = vmatpush1.bf16.msra.mxu0 %v377
    %396 = vmatprep.subr.bf16.mxu0 0
    %397 = vmatpush1.bf16.msra.mxu0 %v378
    %398 = vmatprep.subr.bf16.mxu0 0
    %399 = vmatpush1.bf16.msra.mxu0 %v379
    %400 = vmatprep.subr.bf16.mxu0 0
    %401 = vmatpush1.bf16.msra.mxu0 %v380
    %402 = vmatprep.subr.bf16.mxu0 0
    %403 = vmatpush1.bf16.msra.mxu0 %v381
    %404 = vmatprep.subr.bf16.mxu0 0
    %405 = vmatpush1.bf16.msra.mxu0 %v382
    %406 = vmatprep.subr.bf16.mxu0 0
    %407 = vmatpush1.bf16.msra.mxu0 %v383
    %408 = vmatprep.subr.bf16.mxu0 0
    %409 = vmatpush1.bf16.msra.mxu0 0
    %410 = vmatprep.subr.bf16.mxu0 0
    %411 = vmatpush1.bf16.msra.mxu0 0
    %412 = vmatprep.subr.bf16.mxu0 0
    %413 = vmatpush1.bf16.msra.mxu0 0
    %414 = vmatprep.subr.bf16.mxu0 0
    %415 = vmatpush1.bf16.msra.mxu0 0
    %416 = vmatprep.subr.bf16.mxu0 0
    %417 = vmatpush1.bf16.msra.mxu0 0
    %418 = vmatprep.subr.bf16.mxu0 0
    %419 = vmatpush1.bf16.msra.mxu0 0
    %420 = vmatprep.subr.bf16.mxu0 0
    %421 = vmatpush1.bf16.msra.mxu0 0
    %422 = vmatprep.subr.bf16.mxu0 0
    %423 = vmatpush1.bf16.msra.mxu0 0
    %424 = vmatprep.mubr.bf16.mxu0 0
    %425 = vmatmul.mubr.bf16.gmra.mrb[0].mxu0 %v320
    %v426 = vpop.f32.mrb[0].mxu0
    %v427 = vadd.f32 %v342, %v426
    %v428 = vpop.f32.mrb[0].mxu0
    %v429 = vpop.f32.mrb[0].mxu0
    %v430 = vadd.f32 %v342, %v429
    %v431 = vpop.f32.mrb[0].mxu0
    %432 = vdwg.mxu0
    %433 = vst [vmem:[#allocation10] sm:$0xff] %v427
    %434 = vst [vmem:[#allocation10 + $0x8] sm:$0xff] %v430
    // Predicated region
    $region46: #{tpu_custom_call.1} parent=1 // pred_check
      _
    $region47: #{tpu_custom_call.1} parent=1 // pred_check_branch
      %436 = sbr.rel (0) target = $region49
    $region48: #{tpu_custom_call.1} parent=1 // pred_region
      %s438 = ssub.s32 256, 256
      %439 = vsyncadd [#allocation4], %s438
      %s440 = sshll.u32 [#allocation10], 4
      %s441 = int_to_ptr.vmem [resolvable:$true] %s440
      %446 = dma.vmem_to_hbm [thread:$0]  %s441, 256, %s7, [#allocation4], 128, 128, 8
    $region49: #{tpu_custom_call.1} parent=1 // pred_fallthru
      _
    // Predicated region
    $region50: #{tpu_custom_call.1} parent=1 // pred_check
      _
    $region51: #{tpu_custom_call.1} parent=1 // pred_check_branch
      %448 = sbr.rel (0) target = $region53
    $region52: #{tpu_custom_call.1} parent=1 // pred_region
      %449 = dma.done [#allocation4], 256
    $region53: #{tpu_custom_call.1} parent=1 // pred_fallthru
      _
    %450 = vsyncpa [#allocation3], 1
    %451 = vsyncpa [#allocation6], 1
    %452 = vsyncpa [#allocation9], 1
    %453 = vsyncpa [#allocation4], 1

</llo_original>
